<compile_context>
chip_gen: v7x
topology: tpu7x:2x2x1
jax: 0.10.0
libtpu: 0.0.40
codegen_flags: <defaults>
</compile_context>

<pallas_src>
import math

import jax
import jax.numpy as jnp
from jax.experimental import pallas as pl
from jax.experimental.pallas import tpu as pltpu


# ----------------------------- model dims -----------------------------------
VOCAB = 50        # synthetic SMILES vocab size
VOCAB_PAD = 64    # table rows padded so the one-hot contraction dim is tidy
B = 2             # batch (number of SMILES strings)
S = 8             # sequence length (tokens per string)
D = 32            # hidden size
H = 4             # attention heads
HD = D // H       # head dim
F = 64            # FFN hidden size
N = B * S         # flattened token count

# ---- packed weight slab (D, 512), every block starts on a 128-lane tile ----
W_LANES = 512
W_QKV_OFF = 0      # (D, 3D)  [Wq | Wk | Wv]
W_O_OFF = 128      # (D, D)
W_1_OFF = 256      # (D, F)
W_2T_OFF = 384     # (D, F)   == W2.T

# ---- packed small-parameter slab (8, 128): one param per sublane row -------
P_ROWS = 8
P_LANES = 128
# row 0: bqkv (3D) | row 1: bo (D) | row 2: g1 (D) | row 3: be1 (D)
# row 4: g2  (D)   | row 5: be2(D) | row 6: c1 (F) | row 7: c2  (D)


def _layernorm(x, gamma, beta, eps=1e-5):
    mu = jnp.mean(x, axis=-1, keepdims=True)
    xc = x - mu
    var = jnp.mean(xc * xc, axis=-1, keepdims=True)
    inv = jax.lax.rsqrt(var + eps)
    return xc * inv * gamma + beta


def transformer_layer_kernel(ids_ref,    # (N, 1) int32 token ids (VMEM)
                             table_ref,  # (VOCAB_PAD, D) embedding table (f32)
                             w_ref,      # (D, 512) packed weights (bf16)
                             p_ref,      # (8, 128) packed biases / LN params (f32)
                             out_ref):   # (N, D) hidden states (f32)
    # ---- one-hot matmul embedding gather (MXU; no serialized scalar loads) --
    ids = ids_ref[...]                                           # (N, 1) int32
    iota = jax.lax.broadcasted_iota(jnp.int32, (N, VOCAB_PAD), 1)
    one_hot = (ids == iota).astype(jnp.float32)                  # (N, VOCAB_PAD)
    x = jnp.dot(one_hot, table_ref[...],
                preferred_element_type=jnp.float32)              # (N, D) f32

    # ---- tile-aligned slab extraction (free views) --------------------------
    w = w_ref[...]                                               # bf16
    wqkv = w[:, W_QKV_OFF:W_QKV_OFF + 3 * D]
    wo = w[:, W_O_OFF:W_O_OFF + D]
    w1 = w[:, W_1_OFF:W_1_OFF + F]
    w2t = w[:, W_2T_OFF:W_2T_OFF + F]

    p = p_ref[...]                                               # f32
    bqkv = p[0:1, 0:3 * D]
    bo = p[1:2, 0:D]
    g1, be1 = p[2:3, 0:D], p[3:4, 0:D]
    g2, be2 = p[4:5, 0:D], p[5:6, 0:D]
    c1 = p[6:7, 0:F]
    c2 = p[7:8, 0:D]

    # ---- multi-head self-attention (pre-LN), fused QKV projection -----------
    h1 = _layernorm(x, g1, be1)
    qkv = jnp.dot(h1.astype(jnp.bfloat16), wqkv,
                  preferred_element_type=jnp.float32) + bqkv      # (N, 3D) f32
    qkv3 = qkv.astype(jnp.bfloat16).reshape(B, S, 3 * D)          # bf16 MXU operands

    scale = 1.0 / math.sqrt(HD)
    head_outs = []
    for hi in range(H):                    # static unroll; einsums batch over B
        lo = hi * HD
        qh = qkv3[:, :, lo:lo + HD]                               # (B, S, HD) bf16
        kh = qkv3[:, :, D + lo:D + lo + HD]
        vh = qkv3[:, :, 2 * D + lo:2 * D + lo + HD]
        sc = jnp.einsum('bqd,bkd->bqk', qh, kh,
                        preferred_element_type=jnp.float32) * scale
        sc = sc - jnp.max(sc, axis=-1, keepdims=True)             # f32 softmax
        e = jnp.exp(sc)
        prob = e * pl.reciprocal(jnp.sum(e, axis=-1, keepdims=True), approx=True)
        head_outs.append(jnp.einsum('bqk,bkd->bqd', prob.astype(jnp.bfloat16), vh,
                                    preferred_element_type=jnp.float32))
    attn = jnp.concatenate(head_outs, axis=-1).reshape(N, D)      # (N, D) f32
    attn = jnp.dot(attn.astype(jnp.bfloat16), wo,
                   preferred_element_type=jnp.float32) + bo
    x = x + attn

    # ---- feed-forward (pre-LN) ----------------------------------------------
    h2 = _layernorm(x, g2, be2)
    f1 = jnp.dot(h2.astype(jnp.bfloat16), w1,
                 preferred_element_type=jnp.float32) + c1
    f1 = jax.nn.gelu(f1, approximate=True)                        # f32 on VPU/EUP
    # W2 stored transposed in the slab: contract last dims (no explicit .T).
    f2 = jax.lax.dot_general(f1.astype(jnp.bfloat16), w2t,
                             (((1,), (1,)), ((), ())),
                             preferred_element_type=jnp.float32) + c2
    x = x + f2

    out_ref[...] = x


@jax.jit
def transformer_forward(token_ids_col, emb_table, w_slab, p_slab):
    """token_ids_col: (N, 1) int32 -> (B, S, D) float32 hidden states."""
    # TODO(synk): when the token count per call is scaled up (>=512 tokens),
    # tile the token dim with a grid ("parallel" 2-way split for v7x's two
    # TensorCores) and keep the weight slab resident across steps; at N=16 a
    # collapsed grid is the right choice on every generation.
    out_flat = pl.pallas_call(
        transformer_layer_kernel,
        out_shape=jax.ShapeDtypeStruct((N, D), jnp.float32),
        grid=(1,),
        in_specs=[
            pl.BlockSpec((N, 1), lambda i: (0, 0)),               # token ids
            pl.BlockSpec((VOCAB_PAD, D), lambda i: (0, 0)),       # embedding table
            pl.BlockSpec((D, W_LANES), lambda i: (0, 0)),         # weight slab
            pl.BlockSpec((P_ROWS, P_LANES), lambda i: (0, 0)),    # bias/LN slab
        ],
        out_specs=pl.BlockSpec((N, D), lambda i: (0, 0)),
        compiler_params=pltpu.CompilerParams(
            dimension_semantics=("arbitrary",)),
    )(token_ids_col, emb_table, w_slab, p_slab)
    return out_flat.reshape(B, S, D)


def init_params(key):
    ks = jax.random.split(key, 8)
    sd = 0.02
    wq = sd * jax.random.normal(ks[0], (D, D), jnp.float32)
    wk = sd * jax.random.normal(ks[1], (D, D), jnp.float32)
    wv = sd * jax.random.normal(ks[2], (D, D), jnp.float32)
    wo = sd * jax.random.normal(ks[3], (D, D), jnp.float32)
    w1 = sd * jax.random.normal(ks[4], (D, F), jnp.float32)
    w2 = sd * jax.random.normal(ks[5], (F, D), jnp.float32)
    emb = sd * jax.random.normal(ks[6], (VOCAB, D), jnp.float32)
    emb_table = jnp.pad(emb, ((0, VOCAB_PAD - VOCAB), (0, 0)))    # zero pad rows

    # ---- weight slab (D, 512) bf16, blocks at 128-lane boundaries ----------
    w_slab = jnp.zeros((D, W_LANES), jnp.float32)
    w_slab = w_slab.at[:, W_QKV_OFF:W_QKV_OFF + 3 * D].set(
        jnp.concatenate([wq, wk, wv], axis=1))
    w_slab = w_slab.at[:, W_O_OFF:W_O_OFF + D].set(wo)
    w_slab = w_slab.at[:, W_1_OFF:W_1_OFF + F].set(w1)
    w_slab = w_slab.at[:, W_2T_OFF:W_2T_OFF + F].set(w2.T)
    w_slab = w_slab.astype(jnp.bfloat16)

    # ---- bias / LN slab (8, 128) f32, one parameter per sublane row --------
    p_slab = jnp.zeros((P_ROWS, P_LANES), jnp.float32)
    p_slab = p_slab.at[0, 0:3 * D].set(jnp.zeros((3 * D,), jnp.float32))  # bqkv
    p_slab = p_slab.at[1, 0:D].set(jnp.zeros((D,), jnp.float32))          # bo
    p_slab = p_slab.at[2, 0:D].set(jnp.ones((D,), jnp.float32))           # g1
    p_slab = p_slab.at[3, 0:D].set(jnp.zeros((D,), jnp.float32))          # be1
    p_slab = p_slab.at[4, 0:D].set(jnp.ones((D,), jnp.float32))           # g2
    p_slab = p_slab.at[5, 0:D].set(jnp.zeros((D,), jnp.float32))          # be2
    p_slab = p_slab.at[6, 0:F].set(jnp.zeros((F,), jnp.float32))          # c1
    p_slab = p_slab.at[7, 0:D].set(jnp.zeros((D,), jnp.float32))          # c2
    return w_slab, p_slab, emb_table


def pretrained_transformer_wrapper(token_ids, w_slab, p_slab, emb_table):
    """Equivalent of PretrainedTransformerWrapper.forward on tokenized input."""
    ids_col = token_ids.reshape(-1, 1).astype(jnp.int32)          # (N, 1)
    return transformer_forward(ids_col, emb_table, w_slab, p_slab)


if __name__ == "__main__":
    key = jax.random.PRNGKey(0)
    pkey, tkey = jax.random.split(key)
    w_slab, p_slab, emb_table = init_params(pkey)

    # Synthetic tokenized SMILES batch: (B, S) int32 ids in [0, VOCAB).
    token_ids = jax.random.randint(tkey, (B, S), 0, VOCAB, dtype=jnp.int32)

    out = pretrained_transformer_wrapper(token_ids, w_slab, p_slab, emb_table)
    jax.block_until_ready(out)
    assert out.shape == (B, S, D) and out.dtype == jnp.float32
    assert bool(jnp.all(jnp.isfinite(out)))
    print("KERNEL_OK")
</pallas_src>

<mosaic_0001>
module attributes {stable_mosaic.version = 11 : i64} {
  func.func @transformer_layer_kernel(%arg0: i32, %arg1: memref<16x1xi32, #tpu.memory_space<vmem>>, %arg2: memref<64x32xf32, #tpu.memory_space<vmem>>, %arg3: memref<32x512xbf16, #tpu.memory_space<vmem>>, %arg4: memref<8x128xf32, #tpu.memory_space<vmem>>, %arg5: memref<16x32xf32, #tpu.memory_space<vmem>>) attributes {dimension_semantics = [#tpu.dimension_semantics<arbitrary>], iteration_bounds = array<i64: 1>, scalar_prefetch = 0 : i64, scratch_operands = 0 : i64, tpu.core_type = #tpu.core_type<tc>, window_params = [{pipeline_mode = #tpu.pipeline_mode<synchronous>, transform_indices = @transform_0, window_bounds = array<i64: 16, 1>}, {pipeline_mode = #tpu.pipeline_mode<synchronous>, transform_indices = @transform_1, window_bounds = array<i64: 64, 32>}, {pipeline_mode = #tpu.pipeline_mode<synchronous>, transform_indices = @transform_2, window_bounds = array<i64: 32, 512>}, {pipeline_mode = #tpu.pipeline_mode<synchronous>, transform_indices = @transform_3, window_bounds = array<i64: 8, 128>}, {pipeline_mode = #tpu.pipeline_mode<synchronous>, transform_indices = @transform_4, window_bounds = array<i64: 16, 32>}]} {
    %c0 = arith.constant 0 : index
    %c0_0 = arith.constant 0 : index
    %0 = vector.load %arg1[%c0, %c0_0] : memref<16x1xi32, #tpu.memory_space<vmem>>, vector<16x1xi32>
    %1 = tpu.iota {dimensions = array<i32: 1>} : vector<16x64xi32>
    %2 = vector.broadcast %0 : vector<16x1xi32> to vector<16x64xi32>
    %3 = arith.cmpi eq, %2, %1 : vector<16x64xi32>
    %4 = arith.extui %3 : vector<16x64xi1> to vector<16x64xi32>
    %5 = arith.sitofp %4 : vector<16x64xi32> to vector<16x64xf32>
    %c0_1 = arith.constant 0 : index
    %c0_2 = arith.constant 0 : index
    %6 = vector.load %arg2[%c0_1, %c0_2] : memref<64x32xf32, #tpu.memory_space<vmem>>, vector<64x32xf32>
    %cst = arith.constant dense<0.000000e+00> : vector<16x32xf32>
    %7 = tpu.matmul %5, %6, %cst {dimension_numbers = #tpu.dot_dimension_numbers<[1], [0], [0], [1], [0, 0, 1, 1], [], []>} : vector<16x64xf32>, vector<64x32xf32>, vector<16x32xf32> -> vector<16x32xf32>
    %c0_3 = arith.constant 0 : index
    %c0_4 = arith.constant 0 : index
    %8 = vector.load %arg3[%c0_3, %c0_4] : memref<32x512xbf16, #tpu.memory_space<vmem>>, vector<32x512xbf16>
    %9 = vector.extract_strided_slice %8 {offsets = [0, 0], sizes = [32, 96], strides = [1, 1]} : vector<32x512xbf16> to vector<32x96xbf16>
    %10 = vector.extract_strided_slice %8 {offsets = [0, 128], sizes = [32, 32], strides = [1, 1]} : vector<32x512xbf16> to vector<32x32xbf16>
    %11 = vector.extract_strided_slice %8 {offsets = [0, 256], sizes = [32, 64], strides = [1, 1]} : vector<32x512xbf16> to vector<32x64xbf16>
    %12 = vector.extract_strided_slice %8 {offsets = [0, 384], sizes = [32, 64], strides = [1, 1]} : vector<32x512xbf16> to vector<32x64xbf16>
    %c0_5 = arith.constant 0 : index
    %c0_6 = arith.constant 0 : index
    %13 = vector.load %arg4[%c0_5, %c0_6] : memref<8x128xf32, #tpu.memory_space<vmem>>, vector<8x128xf32>
    %14 = vector.extract_strided_slice %13 {offsets = [0, 0], sizes = [1, 96], strides = [1, 1]} : vector<8x128xf32> to vector<1x96xf32>
    %15 = vector.extract_strided_slice %13 {offsets = [1, 0], sizes = [1, 32], strides = [1, 1]} : vector<8x128xf32> to vector<1x32xf32>
    %16 = vector.extract_strided_slice %13 {offsets = [2, 0], sizes = [1, 32], strides = [1, 1]} : vector<8x128xf32> to vector<1x32xf32>
    %17 = vector.extract_strided_slice %13 {offsets = [3, 0], sizes = [1, 32], strides = [1, 1]} : vector<8x128xf32> to vector<1x32xf32>
    %18 = vector.extract_strided_slice %13 {offsets = [4, 0], sizes = [1, 32], strides = [1, 1]} : vector<8x128xf32> to vector<1x32xf32>
    %19 = vector.extract_strided_slice %13 {offsets = [5, 0], sizes = [1, 32], strides = [1, 1]} : vector<8x128xf32> to vector<1x32xf32>
    %20 = vector.extract_strided_slice %13 {offsets = [6, 0], sizes = [1, 64], strides = [1, 1]} : vector<8x128xf32> to vector<1x64xf32>
    %21 = vector.extract_strided_slice %13 {offsets = [7, 0], sizes = [1, 32], strides = [1, 1]} : vector<8x128xf32> to vector<1x32xf32>
    %cst_7 = arith.constant dense<0.000000e+00> : vector<16xf32>
    %22 = vector.multi_reduction <add>, %7, %cst_7 [1] : vector<16x32xf32> to vector<16xf32>
    %23 = vector.shape_cast %22 : vector<16xf32> to vector<16x1xf32>
    %cst_8 = arith.constant 3.200000e+01 : f32
    %24 = vector.broadcast %cst_8 : f32 to vector<16x1xf32>
    %25 = arith.divf %23, %24 : vector<16x1xf32>
    %26 = vector.broadcast %25 : vector<16x1xf32> to vector<16x32xf32>
    %27 = arith.subf %7, %26 : vector<16x32xf32>
    %28 = arith.mulf %27, %27 : vector<16x32xf32>
    %cst_9 = arith.constant dense<0.000000e+00> : vector<16xf32>
    %29 = vector.multi_reduction <add>, %28, %cst_9 [1] : vector<16x32xf32> to vector<16xf32>
    %30 = vector.shape_cast %29 : vector<16xf32> to vector<16x1xf32>
    %cst_10 = arith.constant 3.200000e+01 : f32
    %31 = vector.broadcast %cst_10 : f32 to vector<16x1xf32>
    %32 = arith.divf %30, %31 : vector<16x1xf32>
    %cst_11 = arith.constant 9.99999974E-6 : f32
    %33 = vector.broadcast %cst_11 : f32 to vector<16x1xf32>
    %34 = arith.addf %32, %33 : vector<16x1xf32>
    %35 = math.rsqrt %34 : vector<16x1xf32>
    %36 = vector.broadcast %35 : vector<16x1xf32> to vector<16x32xf32>
    %37 = arith.mulf %27, %36 : vector<16x32xf32>
    %38 = vector.broadcast %16 : vector<1x32xf32> to vector<16x32xf32>
    %39 = arith.mulf %37, %38 : vector<16x32xf32>
    %40 = vector.broadcast %17 : vector<1x32xf32> to vector<16x32xf32>
    %41 = arith.addf %39, %40 : vector<16x32xf32>
    %42 = arith.truncf %41 : vector<16x32xf32> to vector<16x32xbf16>
    %cst_12 = arith.constant dense<0.000000e+00> : vector<16x96xf32>
    %43 = tpu.matmul %42, %9, %cst_12 {dimension_numbers = #tpu.dot_dimension_numbers<[1], [0], [0], [1], [0, 0, 1, 1], [], []>} : vector<16x32xbf16>, vector<32x96xbf16>, vector<16x96xf32> -> vector<16x96xf32>
    %44 = vector.broadcast %14 : vector<1x96xf32> to vector<16x96xf32>
    %45 = arith.addf %43, %44 : vector<16x96xf32>
    %46 = arith.truncf %45 : vector<16x96xf32> to vector<16x96xbf16>
    %47 = vector.shape_cast %46 : vector<16x96xbf16> to vector<2x8x96xbf16>
    %48 = vector.extract_strided_slice %47 {offsets = [0, 0, 0], sizes = [2, 8, 8], strides = [1, 1, 1]} : vector<2x8x96xbf16> to vector<2x8x8xbf16>
    %49 = vector.extract_strided_slice %47 {offsets = [0, 0, 32], sizes = [2, 8, 8], strides = [1, 1, 1]} : vector<2x8x96xbf16> to vector<2x8x8xbf16>
    %50 = vector.extract_strided_slice %47 {offsets = [0, 0, 64], sizes = [2, 8, 8], strides = [1, 1, 1]} : vector<2x8x96xbf16> to vector<2x8x8xbf16>
    "tpu.trace_start"() <{level = 10 : i32, message = "bqd,bkd->bqk"}> : () -> ()
    %cst_13 = arith.constant dense<0.000000e+00> : vector<2x8x8xf32>
    %51 = tpu.matmul %48, %49, %cst_13 {dimension_numbers = #tpu.dot_dimension_numbers<[2], [2], [1], [1], [0, 0, 0, 1, 1, 1], [0], [0]>} : vector<2x8x8xbf16>, vector<2x8x8xbf16>, vector<2x8x8xf32> -> vector<2x8x8xf32>
    "tpu.trace_stop"() : () -> ()
    %cst_14 = arith.constant 0.353553385 : f32
    %52 = vector.broadcast %cst_14 : f32 to vector<2x8x8xf32>
    %53 = arith.mulf %51, %52 : vector<2x8x8xf32>
    %cst_15 = arith.constant dense<0xFF800000> : vector<2x8xf32>
    %54 = vector.multi_reduction <maximumf>, %53, %cst_15 [2] : vector<2x8x8xf32> to vector<2x8xf32>
    %55 = vector.shape_cast %54 : vector<2x8xf32> to vector<2x8x1xf32>
    %56 = vector.broadcast %55 : vector<2x8x1xf32> to vector<2x8x8xf32>
    %57 = arith.subf %53, %56 : vector<2x8x8xf32>
    %58 = math.exp %57 : vector<2x8x8xf32>
    %cst_16 = arith.constant dense<0.000000e+00> : vector<2x8xf32>
    %59 = vector.multi_reduction <add>, %58, %cst_16 [2] : vector<2x8x8xf32> to vector<2x8xf32>
    %60 = vector.shape_cast %59 : vector<2x8xf32> to vector<2x8x1xf32>
    %61 = tpu.reciprocal %60 {approx = true} : vector<2x8x1xf32> -> vector<2x8x1xf32>
    %62 = vector.broadcast %61 : vector<2x8x1xf32> to vector<2x8x8xf32>
    %63 = arith.mulf %58, %62 : vector<2x8x8xf32>
    %64 = arith.truncf %63 : vector<2x8x8xf32> to vector<2x8x8xbf16>
    "tpu.trace_start"() <{level = 10 : i32, message = "bqk,bkd->bqd"}> : () -> ()
    %cst_17 = arith.constant dense<0.000000e+00> : vector<2x8x8xf32>
    %65 = tpu.matmul %64, %50, %cst_17 {dimension_numbers = #tpu.dot_dimension_numbers<[2], [1], [1], [2], [0, 0, 0, 1, 1, 2], [0], [0]>} : vector<2x8x8xbf16>, vector<2x8x8xbf16>, vector<2x8x8xf32> -> vector<2x8x8xf32>
    "tpu.trace_stop"() : () -> ()
    %66 = vector.extract_strided_slice %47 {offsets = [0, 0, 8], sizes = [2, 8, 8], strides = [1, 1, 1]} : vector<2x8x96xbf16> to vector<2x8x8xbf16>
    %67 = vector.extract_strided_slice %47 {offsets = [0, 0, 40], sizes = [2, 8, 8], strides = [1, 1, 1]} : vector<2x8x96xbf16> to vector<2x8x8xbf16>
    %68 = vector.extract_strided_slice %47 {offsets = [0, 0, 72], sizes = [2, 8, 8], strides = [1, 1, 1]} : vector<2x8x96xbf16> to vector<2x8x8xbf16>
    "tpu.trace_start"() <{level = 10 : i32, message = "bqd,bkd->bqk"}> : () -> ()
    %cst_18 = arith.constant dense<0.000000e+00> : vector<2x8x8xf32>
    %69 = tpu.matmul %66, %67, %cst_18 {dimension_numbers = #tpu.dot_dimension_numbers<[2], [2], [1], [1], [0, 0, 0, 1, 1, 1], [0], [0]>} : vector<2x8x8xbf16>, vector<2x8x8xbf16>, vector<2x8x8xf32> -> vector<2x8x8xf32>
    "tpu.trace_stop"() : () -> ()
    %cst_19 = arith.constant 0.353553385 : f32
    %70 = vector.broadcast %cst_19 : f32 to vector<2x8x8xf32>
    %71 = arith.mulf %69, %70 : vector<2x8x8xf32>
    %cst_20 = arith.constant dense<0xFF800000> : vector<2x8xf32>
    %72 = vector.multi_reduction <maximumf>, %71, %cst_20 [2] : vector<2x8x8xf32> to vector<2x8xf32>
    %73 = vector.shape_cast %72 : vector<2x8xf32> to vector<2x8x1xf32>
    %74 = vector.broadcast %73 : vector<2x8x1xf32> to vector<2x8x8xf32>
    %75 = arith.subf %71, %74 : vector<2x8x8xf32>
    %76 = math.exp %75 : vector<2x8x8xf32>
    %cst_21 = arith.constant dense<0.000000e+00> : vector<2x8xf32>
    %77 = vector.multi_reduction <add>, %76, %cst_21 [2] : vector<2x8x8xf32> to vector<2x8xf32>
    %78 = vector.shape_cast %77 : vector<2x8xf32> to vector<2x8x1xf32>
    %79 = tpu.reciprocal %78 {approx = true} : vector<2x8x1xf32> -> vector<2x8x1xf32>
    %80 = vector.broadcast %79 : vector<2x8x1xf32> to vector<2x8x8xf32>
    %81 = arith.mulf %76, %80 : vector<2x8x8xf32>
    %82 = arith.truncf %81 : vector<2x8x8xf32> to vector<2x8x8xbf16>
    "tpu.trace_start"() <{level = 10 : i32, message = "bqk,bkd->bqd"}> : () -> ()
    %cst_22 = arith.constant dense<0.000000e+00> : vector<2x8x8xf32>
    %83 = tpu.matmul %82, %68, %cst_22 {dimension_numbers = #tpu.dot_dimension_numbers<[2], [1], [1], [2], [0, 0, 0, 1, 1, 2], [0], [0]>} : vector<2x8x8xbf16>, vector<2x8x8xbf16>, vector<2x8x8xf32> -> vector<2x8x8xf32>
    "tpu.trace_stop"() : () -> ()
    %84 = vector.extract_strided_slice %47 {offsets = [0, 0, 16], sizes = [2, 8, 8], strides = [1, 1, 1]} : vector<2x8x96xbf16> to vector<2x8x8xbf16>
    %85 = vector.extract_strided_slice %47 {offsets = [0, 0, 48], sizes = [2, 8, 8], strides = [1, 1, 1]} : vector<2x8x96xbf16> to vector<2x8x8xbf16>
    %86 = vector.extract_strided_slice %47 {offsets = [0, 0, 80], sizes = [2, 8, 8], strides = [1, 1, 1]} : vector<2x8x96xbf16> to vector<2x8x8xbf16>
    "tpu.trace_start"() <{level = 10 : i32, message = "bqd,bkd->bqk"}> : () -> ()
    %cst_23 = arith.constant dense<0.000000e+00> : vector<2x8x8xf32>
    %87 = tpu.matmul %84, %85, %cst_23 {dimension_numbers = #tpu.dot_dimension_numbers<[2], [2], [1], [1], [0, 0, 0, 1, 1, 1], [0], [0]>} : vector<2x8x8xbf16>, vector<2x8x8xbf16>, vector<2x8x8xf32> -> vector<2x8x8xf32>
    "tpu.trace_stop"() : () -> ()
    %cst_24 = arith.constant 0.353553385 : f32
    %88 = vector.broadcast %cst_24 : f32 to vector<2x8x8xf32>
    %89 = arith.mulf %87, %88 : vector<2x8x8xf32>
    %cst_25 = arith.constant dense<0xFF800000> : vector<2x8xf32>
    %90 = vector.multi_reduction <maximumf>, %89, %cst_25 [2] : vector<2x8x8xf32> to vector<2x8xf32>
    %91 = vector.shape_cast %90 : vector<2x8xf32> to vector<2x8x1xf32>
    %92 = vector.broadcast %91 : vector<2x8x1xf32> to vector<2x8x8xf32>
    %93 = arith.subf %89, %92 : vector<2x8x8xf32>
    %94 = math.exp %93 : vector<2x8x8xf32>
    %cst_26 = arith.constant dense<0.000000e+00> : vector<2x8xf32>
    %95 = vector.multi_reduction <add>, %94, %cst_26 [2] : vector<2x8x8xf32> to vector<2x8xf32>
    %96 = vector.shape_cast %95 : vector<2x8xf32> to vector<2x8x1xf32>
    %97 = tpu.reciprocal %96 {approx = true} : vector<2x8x1xf32> -> vector<2x8x1xf32>
    %98 = vector.broadcast %97 : vector<2x8x1xf32> to vector<2x8x8xf32>
    %99 = arith.mulf %94, %98 : vector<2x8x8xf32>
    %100 = arith.truncf %99 : vector<2x8x8xf32> to vector<2x8x8xbf16>
    "tpu.trace_start"() <{level = 10 : i32, message = "bqk,bkd->bqd"}> : () -> ()
    %cst_27 = arith.constant dense<0.000000e+00> : vector<2x8x8xf32>
    %101 = tpu.matmul %100, %86, %cst_27 {dimension_numbers = #tpu.dot_dimension_numbers<[2], [1], [1], [2], [0, 0, 0, 1, 1, 2], [0], [0]>} : vector<2x8x8xbf16>, vector<2x8x8xbf16>, vector<2x8x8xf32> -> vector<2x8x8xf32>
    "tpu.trace_stop"() : () -> ()
    %102 = vector.extract_strided_slice %47 {offsets = [0, 0, 24], sizes = [2, 8, 8], strides = [1, 1, 1]} : vector<2x8x96xbf16> to vector<2x8x8xbf16>
    %103 = vector.extract_strided_slice %47 {offsets = [0, 0, 56], sizes = [2, 8, 8], strides = [1, 1, 1]} : vector<2x8x96xbf16> to vector<2x8x8xbf16>
    %104 = vector.extract_strided_slice %47 {offsets = [0, 0, 88], sizes = [2, 8, 8], strides = [1, 1, 1]} : vector<2x8x96xbf16> to vector<2x8x8xbf16>
    "tpu.trace_start"() <{level = 10 : i32, message = "bqd,bkd->bqk"}> : () -> ()
    %cst_28 = arith.constant dense<0.000000e+00> : vector<2x8x8xf32>
    %105 = tpu.matmul %102, %103, %cst_28 {dimension_numbers = #tpu.dot_dimension_numbers<[2], [2], [1], [1], [0, 0, 0, 1, 1, 1], [0], [0]>} : vector<2x8x8xbf16>, vector<2x8x8xbf16>, vector<2x8x8xf32> -> vector<2x8x8xf32>
    "tpu.trace_stop"() : () -> ()
    %cst_29 = arith.constant 0.353553385 : f32
    %106 = vector.broadcast %cst_29 : f32 to vector<2x8x8xf32>
    %107 = arith.mulf %105, %106 : vector<2x8x8xf32>
    %cst_30 = arith.constant dense<0xFF800000> : vector<2x8xf32>
    %108 = vector.multi_reduction <maximumf>, %107, %cst_30 [2] : vector<2x8x8xf32> to vector<2x8xf32>
    %109 = vector.shape_cast %108 : vector<2x8xf32> to vector<2x8x1xf32>
    %110 = vector.broadcast %109 : vector<2x8x1xf32> to vector<2x8x8xf32>
    %111 = arith.subf %107, %110 : vector<2x8x8xf32>
    %112 = math.exp %111 : vector<2x8x8xf32>
    %cst_31 = arith.constant dense<0.000000e+00> : vector<2x8xf32>
    %113 = vector.multi_reduction <add>, %112, %cst_31 [2] : vector<2x8x8xf32> to vector<2x8xf32>
    %114 = vector.shape_cast %113 : vector<2x8xf32> to vector<2x8x1xf32>
    %115 = tpu.reciprocal %114 {approx = true} : vector<2x8x1xf32> -> vector<2x8x1xf32>
    %116 = vector.broadcast %115 : vector<2x8x1xf32> to vector<2x8x8xf32>
    %117 = arith.mulf %112, %116 : vector<2x8x8xf32>
    %118 = arith.truncf %117 : vector<2x8x8xf32> to vector<2x8x8xbf16>
    "tpu.trace_start"() <{level = 10 : i32, message = "bqk,bkd->bqd"}> : () -> ()
    %cst_32 = arith.constant dense<0.000000e+00> : vector<2x8x8xf32>
    %119 = tpu.matmul %118, %104, %cst_32 {dimension_numbers = #tpu.dot_dimension_numbers<[2], [1], [1], [2], [0, 0, 0, 1, 1, 2], [0], [0]>} : vector<2x8x8xbf16>, vector<2x8x8xbf16>, vector<2x8x8xf32> -> vector<2x8x8xf32>
    "tpu.trace_stop"() : () -> ()
    %120 = tpu.concatenate %65, %83, %101, %119 in 2 : vector<2x8x8xf32>, vector<2x8x8xf32>, vector<2x8x8xf32>, vector<2x8x8xf32> -> vector<2x8x32xf32>
    %121 = vector.shape_cast %120 : vector<2x8x32xf32> to vector<16x32xf32>
    %122 = arith.truncf %121 : vector<16x32xf32> to vector<16x32xbf16>
    %cst_33 = arith.constant dense<0.000000e+00> : vector<16x32xf32>
    %123 = tpu.matmul %122, %10, %cst_33 {dimension_numbers = #tpu.dot_dimension_numbers<[1], [0], [0], [1], [0, 0, 1, 1], [], []>} : vector<16x32xbf16>, vector<32x32xbf16>, vector<16x32xf32> -> vector<16x32xf32>
    %124 = vector.broadcast %15 : vector<1x32xf32> to vector<16x32xf32>
    %125 = arith.addf %123, %124 : vector<16x32xf32>
    %126 = arith.addf %7, %125 : vector<16x32xf32>
    %cst_34 = arith.constant dense<0.000000e+00> : vector<16xf32>
    %127 = vector.multi_reduction <add>, %126, %cst_34 [1] : vector<16x32xf32> to vector<16xf32>
    %128 = vector.shape_cast %127 : vector<16xf32> to vector<16x1xf32>
    %cst_35 = arith.constant 3.200000e+01 : f32
    %129 = vector.broadcast %cst_35 : f32 to vector<16x1xf32>
    %130 = arith.divf %128, %129 : vector<16x1xf32>
    %131 = vector.broadcast %130 : vector<16x1xf32> to vector<16x32xf32>
    %132 = arith.subf %126, %131 : vector<16x32xf32>
    %133 = arith.mulf %132, %132 : vector<16x32xf32>
    %cst_36 = arith.constant dense<0.000000e+00> : vector<16xf32>
    %134 = vector.multi_reduction <add>, %133, %cst_36 [1] : vector<16x32xf32> to vector<16xf32>
    %135 = vector.shape_cast %134 : vector<16xf32> to vector<16x1xf32>
    %cst_37 = arith.constant 3.200000e+01 : f32
    %136 = vector.broadcast %cst_37 : f32 to vector<16x1xf32>
    %137 = arith.divf %135, %136 : vector<16x1xf32>
    %cst_38 = arith.constant 9.99999974E-6 : f32
    %138 = vector.broadcast %cst_38 : f32 to vector<16x1xf32>
    %139 = arith.addf %137, %138 : vector<16x1xf32>
    %140 = math.rsqrt %139 : vector<16x1xf32>
    %141 = vector.broadcast %140 : vector<16x1xf32> to vector<16x32xf32>
    %142 = arith.mulf %132, %141 : vector<16x32xf32>
    %143 = vector.broadcast %18 : vector<1x32xf32> to vector<16x32xf32>
    %144 = arith.mulf %142, %143 : vector<16x32xf32>
    %145 = vector.broadcast %19 : vector<1x32xf32> to vector<16x32xf32>
    %146 = arith.addf %144, %145 : vector<16x32xf32>
    %147 = arith.truncf %146 : vector<16x32xf32> to vector<16x32xbf16>
    %cst_39 = arith.constant dense<0.000000e+00> : vector<16x64xf32>
    %148 = tpu.matmul %147, %11, %cst_39 {dimension_numbers = #tpu.dot_dimension_numbers<[1], [0], [0], [1], [0, 0, 1, 1], [], []>} : vector<16x32xbf16>, vector<32x64xbf16>, vector<16x64xf32> -> vector<16x64xf32>
    %149 = vector.broadcast %20 : vector<1x64xf32> to vector<16x64xf32>
    %150 = arith.addf %148, %149 : vector<16x64xf32>
    %151 = arith.mulf %150, %150 : vector<16x64xf32>
    %152 = arith.mulf %150, %151 : vector<16x64xf32>
    %cst_40 = arith.constant 4.471500e-02 : f32
    %153 = vector.broadcast %cst_40 : f32 to vector<16x64xf32>
    %154 = arith.mulf %153, %152 : vector<16x64xf32>
    %155 = arith.addf %150, %154 : vector<16x64xf32>
    %cst_41 = arith.constant 0.797884583 : f32
    %156 = vector.broadcast %cst_41 : f32 to vector<16x64xf32>
    %157 = arith.mulf %156, %155 : vector<16x64xf32>
    %158 = math.tanh %157 : vector<16x64xf32>
    %cst_42 = arith.constant 1.000000e+00 : f32
    %159 = vector.broadcast %cst_42 : f32 to vector<16x64xf32>
    %160 = arith.addf %159, %158 : vector<16x64xf32>
    %cst_43 = arith.constant 5.000000e-01 : f32
    %161 = vector.broadcast %cst_43 : f32 to vector<16x64xf32>
    %162 = arith.mulf %161, %160 : vector<16x64xf32>
    %163 = arith.mulf %150, %162 : vector<16x64xf32>
    %164 = arith.truncf %163 : vector<16x64xf32> to vector<16x64xbf16>
    %cst_44 = arith.constant dense<0.000000e+00> : vector<16x32xf32>
    %165 = tpu.matmul %164, %12, %cst_44 {dimension_numbers = #tpu.dot_dimension_numbers<[1], [1], [0], [0], [0, 0, 1, 0], [], []>} : vector<16x64xbf16>, vector<32x64xbf16>, vector<16x32xf32> -> vector<16x32xf32>
    %166 = vector.broadcast %21 : vector<1x32xf32> to vector<16x32xf32>
    %167 = arith.addf %165, %166 : vector<16x32xf32>
    %168 = arith.addf %126, %167 : vector<16x32xf32>
    %c0_45 = arith.constant 0 : index
    %c0_46 = arith.constant 0 : index
    %169 = vector.load %arg5[%c0_45, %c0_46] : memref<16x32xf32, #tpu.memory_space<vmem>>, vector<16x32xf32>
    tpu.vector_store %arg5[%c0_45, %c0_46], %168 {strides = array<i32>} : memref<16x32xf32, #tpu.memory_space<vmem>>, vector<16x32xf32>,
    return
  }
  func.func @transform_0(%arg0: i32) -> (i32, i32) {
    %c0_i32 = arith.constant 0 : i32
    %c0_i32_0 = arith.constant 0 : i32
    %c0_i32_1 = arith.constant 0 : i32
    return %c0_i32, %c0_i32_0 : i32, i32
  }
  func.func @transform_1(%arg0: i32) -> (i32, i32) {
    %c0_i32 = arith.constant 0 : i32
    %c0_i32_0 = arith.constant 0 : i32
    %c0_i32_1 = arith.constant 0 : i32
    return %c0_i32, %c0_i32_0 : i32, i32
  }
  func.func @transform_2(%arg0: i32) -> (i32, i32) {
    %c0_i32 = arith.constant 0 : i32
    %c0_i32_0 = arith.constant 0 : i32
    %c0_i32_1 = arith.constant 0 : i32
    return %c0_i32, %c0_i32_0 : i32, i32
  }
  func.func @transform_3(%arg0: i32) -> (i32, i32) {
    %c0_i32 = arith.constant 0 : i32
    %c0_i32_0 = arith.constant 0 : i32
    %c0_i32_1 = arith.constant 0 : i32
    return %c0_i32, %c0_i32_0 : i32, i32
  }
  func.func @transform_4(%arg0: i32) -> (i32, i32) {
    %c0_i32 = arith.constant 0 : i32
    %c0_i32_0 = arith.constant 0 : i32
    %c0_i32_1 = arith.constant 0 : i32
    return %c0_i32, %c0_i32_0 : i32, i32
  }
}

</mosaic_0001>

<llo_original>
// kernel: transformer_forward.1
$region0: #{transformer_forward.1}
  #allocation0 [shape = 'u32[]', space=smem, size = 0x4, offset = 0x4, fixed_abs, tag = 'smem constant byte address 0x4 - core index']
  #allocation1 [shape = 'u32[144,128]{1,0:T(1,128)}', space=vmem, size = 0x12000, scoped, tag = 'internal scratch']
  %s0 = inlined_call_operand.vmem [shape: s32[16,1], index: 0, kind: input, shape index: {}]
  %s1 = inlined_call_operand.vmem [shape: f32[64,32], index: 1, kind: input, shape index: {}]
  %s2 = inlined_call_operand.vmem [shape: bf16[32,512], index: 2, kind: input, shape index: {}]
  %s3 = inlined_call_operand.vmem [shape: f32[8,128], index: 3, kind: input, shape index: {}]
  %s4 = inlined_call_operand.hbm [shape: f32[16,32], index: 4, kind: output, shape index: {}]
  %s5 = sld [smem:[#allocation0]]
  $region26: #{transformer_forward.1} parent=0
    _
  %s7 = ssub.s32 1, %s5
  %s8 = scalar_select 0, %s7, %s5
  $region1: #{transformer_forward.1} parent=0
    #allocation2 [shape = 'u8[8192]{0}', space=vmem, size = 0x2000, scoped, tag = 'output window, operand 0, single buffered']
    #allocation3 [shape = 's32[1]{0}', space=sflag, size = 0x4, scoped, tag = 'scoped memory for transformer_forward.1']
    %9 = vsyncpa [#allocation3], 0
    // Predicated region
    $region2: #{transformer_forward.1} parent=1 // pred_check
      _
    $region3: #{transformer_forward.1} parent=1 // pred_check_branch
      %11 = sbr.rel (0) target = $region5
    $region4: #{transformer_forward.1} parent=1 // pred_region
      _
    $region5: #{transformer_forward.1} parent=1 // pred_fallthru
      _
    // Predicated region
    $region6: #{transformer_forward.1} parent=1 // pred_check
      _
    $region7: #{transformer_forward.1} parent=1 // pred_check_branch
      %13 = sbr.rel (0) target = $region9
    $region8: #{transformer_forward.1} parent=1 // pred_region
      _
    $region9: #{transformer_forward.1} parent=1 // pred_fallthru
      _
    // Predicated region
    $region10: #{transformer_forward.1} parent=1 // pred_check
      _
    $region11: #{transformer_forward.1} parent=1 // pred_check_branch
      %15 = sbr.rel (0) target = $region13
    $region12: #{transformer_forward.1} parent=1 // pred_region
      _
    $region13: #{transformer_forward.1} parent=1 // pred_fallthru
      _
    // Predicated region
    $region14: #{transformer_forward.1} parent=1 // pred_check
      _
    $region15: #{transformer_forward.1} parent=1 // pred_check_branch
      %17 = sbr.rel (0) target = $region17
    $region16: #{transformer_forward.1} parent=1 // pred_region
      _
    $region17: #{transformer_forward.1} parent=1 // pred_fallthru
      _
    %v19 = vld [vmem:[%s0] sm:$0xff]
    %v20 = vld [vmem:[%s0 + $0x8] sm:$0xff]
    %v21 = vlaneseq
    %v22 = vand.u32 %v21, 127
    %23 = vset.pattern.permute.xlu0 0
    %24 = vperm.xlu0 %23, %v19
    %v25 = vpop.permute.xlu0 %24
    %26 = vset.pattern.permute.xlu0 0
    %27 = vperm.xlu0 %26, %v20
    %v28 = vpop.permute.xlu0 %27
    %vm29 = vcmp.eq.s32.totalorder %v25, %v22
    %vm30 = vcmp.eq.s32.totalorder %v28, %v22
    %v31 = vsel %vm29, 1, 0
    %v32 = vsel %vm30, 1, 0
    %v33 = vcvt.s32.f32 %v31
    %v34 = vcvt.s32.f32 %v32
    %v35 = vld [vmem:[%s1] sm:$0xff]
    %v36 = vld [vmem:[%s1 + $0x8] sm:$0xff]
    %v37 = vld [vmem:[%s1 + $0x10] sm:$0xff]
    %v38 = vld [vmem:[%s1 + $0x18] sm:$0xff]
    %v39 = vld [vmem:[%s1 + $0x20] sm:$0xff]
    %v40 = vld [vmem:[%s1 + $0x28] sm:$0xff]
    %v41 = vld [vmem:[%s1 + $0x30] sm:$0xff]
    %v42 = vld [vmem:[%s1 + $0x38] sm:$0xff]
    %vm43 = vcmask 523264
    %v45 = vsel %vm43, %v33, 0
    %v48 = vsel %vm43, %v34, 0
    %50 = vmatprep.subr.mxu0 0.0
    %51 = vmatpush1.msra.mxu0 %v35
    %52 = vmatprep.subr.mxu0 0.0
    %53 = vmatpush1.msra.mxu0 %v36
    %54 = vmatprep.subr.mxu0 0.0
    %55 = vmatpush1.msra.mxu0 %v37
    %56 = vmatprep.subr.mxu0 0.0
    %57 = vmatpush1.msra.mxu0 %v38
    %58 = vmatprep.subr.mxu0 0.0
    %59 = vmatpush1.msra.mxu0 %v39
    %60 = vmatprep.subr.mxu0 0.0
    %61 = vmatpush1.msra.mxu0 %v40
    %62 = vmatprep.subr.mxu0 0.0
    %63 = vmatpush1.msra.mxu0 %v41
    %64 = vmatprep.subr.mxu0 0.0
    %65 = vmatpush1.msra.mxu0 %v42
    %66 = vmatprep.subr.mxu0 0.0
    %67 = vmatpush1.msra.mxu0 0.0
    %68 = vmatprep.subr.mxu0 0.0
    %69 = vmatpush1.msra.mxu0 0.0
    %70 = vmatprep.subr.mxu0 0.0
    %71 = vmatpush1.msra.mxu0 0.0
    %72 = vmatprep.subr.mxu0 0.0
    %73 = vmatpush1.msra.mxu0 0.0
    %74 = vmatprep.subr.mxu0 0.0
    %75 = vmatpush1.msra.mxu0 0.0
    %76 = vmatprep.subr.mxu0 0.0
    %77 = vmatpush1.msra.mxu0 0.0
    %78 = vmatprep.subr.mxu0 0.0
    %79 = vmatpush1.msra.mxu0 0.0
    %80 = vmatprep.subr.mxu0 0.0
    %81 = vmatpush1.msra.mxu0 0.0
    %82 = vmatprep.subr.mxu0 0.0
    %83 = vmatpush1.msra.mxu0 0.0
    %84 = vmatprep.subr.mxu0 0.0
    %85 = vmatpush1.msra.mxu0 0.0
    %86 = vmatprep.subr.mxu0 0.0
    %87 = vmatpush1.msra.mxu0 0.0
    %88 = vmatprep.subr.mxu0 0.0
    %89 = vmatpush1.msra.mxu0 0.0
    %90 = vmatprep.subr.mxu0 0.0
    %91 = vmatpush1.msra.mxu0 0.0
    %92 = vmatprep.subr.mxu0 0.0
    %93 = vmatpush1.msra.mxu0 0.0
    %94 = vmatprep.subr.mxu0 0.0
    %95 = vmatpush1.msra.mxu0 0.0
    %96 = vmatprep.subr.mxu0 0.0
    %97 = vmatpush1.msra.mxu0 0.0
    %98 = vmatprep.subr.mxu0 0.0
    %99 = vmatpush1.msra.mxu0 0.0
    %100 = vmatprep.subr.mxu0 0.0
    %101 = vmatpush1.msra.mxu0 0.0
    %102 = vmatprep.subr.mxu0 0.0
    %103 = vmatpush1.msra.mxu0 0.0
    %104 = vmatprep.subr.mxu0 0.0
    %105 = vmatpush1.msra.mxu0 0.0
    %106 = vmatprep.subr.mxu0 0.0
    %107 = vmatpush1.msra.mxu0 0.0
    %108 = vmatprep.subr.mxu0 0.0
    %109 = vmatpush1.msra.mxu0 0.0
    %110 = vmatprep.subr.mxu0 0.0
    %111 = vmatpush1.msra.mxu0 0.0
    %112 = vmatprep.subr.mxu0 0.0
    %113 = vmatpush1.msra.mxu0 0.0
    %114 = vmatprep.mubr.f32.mxu0 0.0
    %115 = vmatmul.mubr.f32.gmra.mrb[0].mxu0 %v45
    %v116 = vpop.f32.mrb[0].mxu0
    %v117 = vadd.f32 0.0, %v116
    %v118 = vpop.f32.mrb[0].mxu0
    %119 = vmatprep.mubr.f32.mxu0 0.0
    %120 = vmatmul.mubr.f32.gmra.mrb[0].mxu0 %v48
    %v121 = vpop.f32.mrb[0].mxu0
    %v122 = vadd.f32 0.0, %v121
    %v123 = vpop.f32.mrb[0].mxu0
    %124 = vdwg.mxu0
    %v125 = vld [vmem:[%s2] sm:$0xff]
    %v126 = vld [vmem:[%s2 + $0x8] sm:$0xff]
    %v127 = vld [vmem:[%s2 + $0x10] sm:$0xff]
    %v128 = vld [vmem:[%s2 + $0x18] sm:$0xff]
    %v129 = vld [vmem:[%s2 + $0x20] sm:$0xff]
    %v130 = vld [vmem:[%s2 + $0x28] sm:$0xff]
    %v131 = vld [vmem:[%s2 + $0x30] sm:$0xff]
    %v132 = vld [vmem:[%s2 + $0x38] sm:$0xff]
    %v133 = vld [vmem:[%s3] sm:$0xff]
    %vm134 = vcmask 261120
    %v135 = vsel %vm134, %v117, 0.0
    %136 = vadd.xlane.f32.xlu0 %v135
    %v137 = vpop.xlane.xlu0 %136
    %v138 = vsel %vm134, %v122, 0.0
    %139 = vadd.xlane.f32.xlu0 %v138
    %v140 = vpop.xlane.xlu0 %139
    %v141 = vrcp.pop 32.0
    %v142 = vmul.f32 %v137, %v141
    %v143 = vmul.f32 %v140, %v141
    %v144 = vsub.f32 %v117, %v142
    %v145 = vsub.f32 %v122, %v143
    %v146 = vmul.f32 %v144, %v144
    %v147 = vmul.f32 %v145, %v145
    %v148 = vsel %vm134, %v146, 0.0
    %149 = vadd.xlane.f32.xlu0 %v148
    %v150 = vpop.xlane.xlu0 %149
    %v151 = vsel %vm134, %v147, 0.0
    %152 = vadd.xlane.f32.xlu0 %v151
    %v153 = vpop.xlane.xlu0 %152
    %v154 = vmul.f32 %v150, %v141
    %v155 = vmul.f32 %v153, %v141
    %v156 = vadd.f32 %v154, 1e-05
    %v157 = vadd.f32 %v155, 1e-05
    %v158 = vrsqrt.pop %v156
    %v159 = vrsqrt.pop %v157
    %v160 = vmul.f32 %v144, %v158
    %v161 = vmul.f32 %v145, %v159
    %v162 = vlaneseq
    %v163 = vshrl.u32 %v162, 7
    %v164 = vsub.s32 2, %v163
    %v165 = vrot.slane %v133, %v164
    %v166 = vmul.f32 %v160, %v165
    %v167 = vmul.f32 %v161, %v165
    %v168 = vlaneseq
    %v169 = vshrl.u32 %v168, 7
    %v170 = vsub.s32 3, %v169
    %v171 = vrot.slane %v133, %v170
    %v172 = vadd.f32 %v166, %v171
    %v173 = vadd.f32 %v167, %v171
    %v174 = vpack.c.bf16 %v173, %v172
    %v175 = vlaneseq
    %v176 = vshrl.u32 %v175, 7
    %v177 = vsub.s32 0, %v176
    %v178 = vrot.slane %v133, %v177
    %v183 = vunpack.c.l.b16 %v125
    %v184 = vunpack.c.l.b16 %v127
    %v185 = vunpack.c.l.b16 %v129
    %v186 = vunpack.c.l.b16 %v131
    %v187 = vpack.c.b16 %v184, %v183
    %v188 = vpack.c.b16 %v186, %v185
    %v192 = vsel %vm134, %v174, 0
    %194 = vmatprep.subr.bf16.mxu0 0
    %195 = vmatpush1.bf16.msra.mxu0 %v187
    %196 = vmatprep.subr.bf16.mxu0 0
    %197 = vmatpush1.bf16.msra.mxu0 %v188
    %198 = vmatprep.subr.bf16.mxu0 0
    %199 = vmatpush1.bf16.msra.mxu0 0
    %200 = vmatprep.subr.bf16.mxu0 0
    %201 = vmatpush1.bf16.msra.mxu0 0
    %202 = vmatprep.subr.bf16.mxu0 0
    %203 = vmatpush1.bf16.msra.mxu0 0
    %204 = vmatprep.subr.bf16.mxu0 0
    %205 = vmatpush1.bf16.msra.mxu0 0
    %206 = vmatprep.subr.bf16.mxu0 0
    %207 = vmatpush1.bf16.msra.mxu0 0
    %208 = vmatprep.subr.bf16.mxu0 0
    %209 = vmatpush1.bf16.msra.mxu0 0
    %210 = vmatprep.subr.bf16.mxu0 0
    %211 = vmatpush1.bf16.msra.mxu0 0
    %212 = vmatprep.subr.bf16.mxu0 0
    %213 = vmatpush1.bf16.msra.mxu0 0
    %214 = vmatprep.subr.bf16.mxu0 0
    %215 = vmatpush1.bf16.msra.mxu0 0
    %216 = vmatprep.subr.bf16.mxu0 0
    %217 = vmatpush1.bf16.msra.mxu0 0
    %218 = vmatprep.subr.bf16.mxu0 0
    %219 = vmatpush1.bf16.msra.mxu0 0
    %220 = vmatprep.subr.bf16.mxu0 0
    %221 = vmatpush1.bf16.msra.mxu0 0
    %222 = vmatprep.subr.bf16.mxu0 0
    %223 = vmatpush1.bf16.msra.mxu0 0
    %224 = vmatprep.subr.bf16.mxu0 0
    %225 = vmatpush1.bf16.msra.mxu0 0
    %226 = vmatprep.mubr.bf16.mxu0 0
    %227 = vmatmul.mubr.bf16.gmra.mrb[0].mxu0 %v192
    %v228 = vpop.f32.mrb[0].mxu0
    %v229 = vadd.f32 %v178, %v228
    %v230 = vpop.f32.mrb[0].mxu0
    %v231 = vpop.f32.mrb[0].mxu0
    %v232 = vadd.f32 %v178, %v231
    %v233 = vpop.f32.mrb[0].mxu0
    %234 = vdwg.mxu0
    %v235 = vpack.c.bf16 %v232, %v229
    %v237 = vunpack.c.l.b16 %v235
    %v238 = vunpack.c.h.b16 %v235
    %v239 = vpack.c.b16 %v237, %v237
    %v240 = vpack.c.b16 %v238, %v238
    %241 = vrot.lane.b32.xlu0 %v239, 96
    %v242 = vpop.permute.xlu0 %241
    %vm243 = vcmask 64512
    %v245 = vsel %vm243, %v239, 0
    %v248 = vsel %vm243, %v242, 0
    %250 = vmatprep.subr.bf16.mxu0 0
    %251 = vmatpush1.bf16.xpose.msra.mxu0 %v248
    %252 = vmatprep.subr.bf16.mxu0 0
    %253 = vmatpush1.bf16.xpose.msra.mxu0 0
    %254 = vmatprep.subr.bf16.mxu0 0
    %255 = vmatpush1.bf16.xpose.msra.mxu0 0
    %256 = vmatprep.subr.bf16.mxu0 0
    %257 = vmatpush1.bf16.xpose.msra.mxu0 0
    %258 = vmatprep.subr.bf16.mxu0 0
    %259 = vmatpush1.bf16.xpose.msra.mxu0 0
    %260 = vmatprep.subr.bf16.mxu0 0
    %261 = vmatpush1.bf16.xpose.msra.mxu0 0
    %262 = vmatprep.subr.bf16.mxu0 0
    %263 = vmatpush1.bf16.xpose.msra.mxu0 0
    %264 = vmatprep.subr.bf16.mxu0 0
    %265 = vmatpush1.bf16.xpose.msra.mxu0 0
    %266 = vmatprep.subr.bf16.mxu0 0
    %267 = vmatpush1.bf16.xpose.msra.mxu0 0
    %268 = vmatprep.subr.bf16.mxu0 0
    %269 = vmatpush1.bf16.xpose.msra.mxu0 0
    %270 = vmatprep.subr.bf16.mxu0 0
    %271 = vmatpush1.bf16.xpose.msra.mxu0 0
    %272 = vmatprep.subr.bf16.mxu0 0
    %273 = vmatpush1.bf16.xpose.msra.mxu0 0
    %274 = vmatprep.subr.bf16.mxu0 0
    %275 = vmatpush1.bf16.xpose.msra.mxu0 0
    %276 = vmatprep.subr.bf16.mxu0 0
    %277 = vmatpush1.bf16.xpose.msra.mxu0 0
    %278 = vmatprep.subr.bf16.mxu0 0
    %279 = vmatpush1.bf16.xpose.msra.mxu0 0
    %280 = vmatprep.subr.bf16.mxu0 0
    %281 = vmatpush1.bf16.xpose.msra.mxu0 0
    %282 = vmatprep.mubr.bf16.mxu0 0
    %283 = vmatmul.mubr.bf16.gmra.mrb[0].mxu0 %v245
    %v284 = vpop.f32.mrb[0].mxu0
    %v285 = vadd.f32 0.0, %v284
    %v286 = vpop.f32.mrb[0].mxu0
    %v287 = vpop.f32.mrb[0].mxu0
    %v288 = vpop.f32.mrb[0].mxu0
    %289 = vdwg.mxu0
    %290 = vrot.lane.b32.xlu0 %v240, 96
    %v291 = vpop.permute.xlu0 %290
    %v293 = vsel %vm243, %v240, 0
    %v296 = vsel %vm243, %v291, 0
    %298 = vmatprep.subr.bf16.mxu0 0
    %299 = vmatpush1.bf16.xpose.msra.mxu0 %v296
    %300 = vmatprep.subr.bf16.mxu0 0
    %301 = vmatpush1.bf16.xpose.msra.mxu0 0
    %302 = vmatprep.subr.bf16.mxu0 0
    %303 = vmatpush1.bf16.xpose.msra.mxu0 0
    %304 = vmatprep.subr.bf16.mxu0 0
    %305 = vmatpush1.bf16.xpose.msra.mxu0 0
    %306 = vmatprep.subr.bf16.mxu0 0
    %307 = vmatpush1.bf16.xpose.msra.mxu0 0
    %308 = vmatprep.subr.bf16.mxu0 0
    %309 = vmatpush1.bf16.xpose.msra.mxu0 0
    %310 = vmatprep.subr.bf16.mxu0 0
    %311 = vmatpush1.bf16.xpose.msra.mxu0 0
    %312 = vmatprep.subr.bf16.mxu0 0
    %313 = vmatpush1.bf16.xpose.msra.mxu0 0
    %314 = vmatprep.subr.bf16.mxu0 0
    %315 = vmatpush1.bf16.xpose.msra.mxu0 0
    %316 = vmatprep.subr.bf16.mxu0 0
    %317 = vmatpush1.bf16.xpose.msra.mxu0 0
    %318 = vmatprep.subr.bf16.mxu0 0
    %319 = vmatpush1.bf16.xpose.msra.mxu0 0
    %320 = vmatprep.subr.bf16.mxu0 0
    %321 = vmatpush1.bf16.xpose.msra.mxu0 0
    %322 = vmatprep.subr.bf16.mxu0 0
    %323 = vmatpush1.bf16.xpose.msra.mxu0 0
    %324 = vmatprep.subr.bf16.mxu0 0
    %325 = vmatpush1.bf16.xpose.msra.mxu0 0
    %326 = vmatprep.subr.bf16.mxu0 0
    %327 = vmatpush1.bf16.xpose.msra.mxu0 0
    %328 = vmatprep.subr.bf16.mxu0 0
    %329 = vmatpush1.bf16.xpose.msra.mxu0 0
    %330 = vmatprep.mubr.bf16.mxu0 0
    %331 = vmatmul.mubr.bf16.gmra.mrb[0].mxu0 %v293
    %v332 = vpop.f32.mrb[0].mxu0
    %v333 = vadd.f32 0.0, %v332
    %v334 = vpop.f32.mrb[0].mxu0
    %v335 = vpop.f32.mrb[0].mxu0
    %v336 = vpop.f32.mrb[0].mxu0
    %337 = vdwg.mxu0
    %v338 = vmul.f32 %v285, 0.35355338
    %v339 = vmul.f32 %v333, 0.35355338
    %v340 = vsel %vm243, %v338, -inf
    %341 = vmax.xlane.f32.xlu0 %v340
    %v342 = vpop.xlane.xlu0 %341
    %v343 = vsel %vm243, %v339, -inf
    %344 = vmax.xlane.f32.xlu0 %v343
    %v345 = vpop.xlane.xlu0 %344
    %v346 = vsub.f32 %v338, %v342
    %v347 = vsub.f32 %v339, %v345
    %v348 = vmul.f32 %v346, 1.442695
    %v349 = vpow.pop %v348
    %v350 = vmul.f32 %v347, 1.442695
    %v351 = vpow.pop %v350
    %v352 = vsel %vm243, %v349, 0.0
    %353 = vadd.xlane.f32.xlu0 %v352
    %v354 = vpop.xlane.xlu0 %353
    %v355 = vsel %vm243, %v351, 0.0
    %356 = vadd.xlane.f32.xlu0 %v355
    %v357 = vpop.xlane.xlu0 %356
    %v358 = vrcp.pop %v354
    %v359 = vrcp.pop %v357
    %v360 = vmul.f32 %v349, %v358
    %v361 = vmul.f32 %v351, %v359
    %v362 = vpack.c.bf16 %v360, %v360
    %v363 = vpack.c.bf16 %v361, %v361
    %364 = vrot.lane.b32.xlu0 %v239, 64
    %v365 = vpop.permute.xlu0 %364
    %v367 = vsel %vm243, %v362, 0
    %vm369 = vcmask 1043456
    %v371 = vsel %vm369, %v365, 0
    %373 = vmatprep.subr.bf16.mxu0 0
    %374 = vmatpush1.bf16.msra.mxu0 %v371
    %375 = vmatprep.subr.bf16.mxu0 0
    %376 = vmatpush1.bf16.msra.mxu0 0
    %377 = vmatprep.subr.bf16.mxu0 0
    %378 = vmatpush1.bf16.msra.mxu0 0
    %379 = vmatprep.subr.bf16.mxu0 0
    %380 = vmatpush1.bf16.msra.mxu0 0
    %381 = vmatprep.subr.bf16.mxu0 0
    %382 = vmatpush1.bf16.msra.mxu0 0
    %383 = vmatprep.subr.bf16.mxu0 0
    %384 = vmatpush1.bf16.msra.mxu0 0
    %385 = vmatprep.subr.bf16.mxu0 0
    %386 = vmatpush1.bf16.msra.mxu0 0
    %387 = vmatprep.subr.bf16.mxu0 0
    %388 = vmatpush1.bf16.msra.mxu0 0
    %389 = vmatprep.subr.bf16.mxu0 0
    %390 = vmatpush1.bf16.msra.mxu0 0
    %391 = vmatprep.subr.bf16.mxu0 0
    %392 = vmatpush1.bf16.msra.mxu0 0
    %393 = vmatprep.subr.bf16.mxu0 0
    %394 = vmatpush1.bf16.msra.mxu0 0
    %395 = vmatprep.subr.bf16.mxu0 0
    %396 = vmatpush1.bf16.msra.mxu0 0
    %397 = vmatprep.subr.bf16.mxu0 0
    %398 = vmatpush1.bf16.msra.mxu0 0
    %399 = vmatprep.subr.bf16.mxu0 0
    %400 = vmatpush1.bf16.msra.mxu0 0
    %401 = vmatprep.subr.bf16.mxu0 0
    %402 = vmatpush1.bf16.msra.mxu0 0
    %403 = vmatprep.subr.bf16.mxu0 0
    %404 = vmatpush1.bf16.msra.mxu0 0
    %405 = vmatprep.mubr.bf16.mxu0 0
    %406 = vmatmul.mubr.bf16.gmra.mrb[0].mxu0 %v367
    %v407 = vpop.f32.mrb[0].mxu0
    %v408 = vadd.f32 0.0, %v407
    %v409 = vpop.f32.mrb[0].mxu0
    %v410 = vpop.f32.mrb[0].mxu0
    %v411 = vpop.f32.mrb[0].mxu0
    %412 = vdwg.mxu0
    %413 = vrot.lane.b32.xlu0 %v240, 64
    %v414 = vpop.permute.xlu0 %413
    %v416 = vsel %vm243, %v363, 0
    %v419 = vsel %vm369, %v414, 0
    %421 = vmatprep.subr.bf16.mxu0 0
    %422 = vmatpush1.bf16.msra.mxu0 %v419
    %423 = vmatprep.subr.bf16.mxu0 0
    %424 = vmatpush1.bf16.msra.mxu0 0
    %425 = vmatprep.subr.bf16.mxu0 0
    %426 = vmatpush1.bf16.msra.mxu0 0
    %427 = vmatprep.subr.bf16.mxu0 0
    %428 = vmatpush1.bf16.msra.mxu0 0
    %429 = vmatprep.subr.bf16.mxu0 0
    %430 = vmatpush1.bf16.msra.mxu0 0
    %431 = vmatprep.subr.bf16.mxu0 0
    %432 = vmatpush1.bf16.msra.mxu0 0
    %433 = vmatprep.subr.bf16.mxu0 0
    %434 = vmatpush1.bf16.msra.mxu0 0
    %435 = vmatprep.subr.bf16.mxu0 0
    %436 = vmatpush1.bf16.msra.mxu0 0
    %437 = vmatprep.subr.bf16.mxu0 0
    %438 = vmatpush1.bf16.msra.mxu0 0
    %439 = vmatprep.subr.bf16.mxu0 0
    %440 = vmatpush1.bf16.msra.mxu0 0
    %441 = vmatprep.subr.bf16.mxu0 0
    %442 = vmatpush1.bf16.msra.mxu0 0
    %443 = vmatprep.subr.bf16.mxu0 0
    %444 = vmatpush1.bf16.msra.mxu0 0
    %445 = vmatprep.subr.bf16.mxu0 0
    %446 = vmatpush1.bf16.msra.mxu0 0
    %447 = vmatprep.subr.bf16.mxu0 0
    %448 = vmatpush1.bf16.msra.mxu0 0
    %449 = vmatprep.subr.bf16.mxu0 0
    %450 = vmatpush1.bf16.msra.mxu0 0
    %451 = vmatprep.subr.bf16.mxu0 0
    %452 = vmatpush1.bf16.msra.mxu0 0
    %453 = vmatprep.mubr.bf16.mxu0 0
    %454 = vmatmul.mubr.bf16.gmra.mrb[0].mxu0 %v416
    %v455 = vpop.f32.mrb[0].mxu0
    %v456 = vadd.f32 0.0, %v455
    %v457 = vpop.f32.mrb[0].mxu0
    %v458 = vpop.f32.mrb[0].mxu0
    %v459 = vpop.f32.mrb[0].mxu0
    %460 = vdwg.mxu0
    %461 = vrot.lane.b32.xlu0 %v239, 120
    %v462 = vpop.permute.xlu0 %461
    %463 = vrot.lane.b32.xlu0 %v239, 88
    %v464 = vpop.permute.xlu0 %463
    %v466 = vsel %vm243, %v462, 0
    %v469 = vsel %vm243, %v464, 0
    %471 = vmatprep.subr.bf16.mxu0 0
    %472 = vmatpush1.bf16.xpose.msra.mxu0 %v469
    %473 = vmatprep.subr.bf16.mxu0 0
    %474 = vmatpush1.bf16.xpose.msra.mxu0 0
    %475 = vmatprep.subr.bf16.mxu0 0
    %476 = vmatpush1.bf16.xpose.msra.mxu0 0
    %477 = vmatprep.subr.bf16.mxu0 0
    %478 = vmatpush1.bf16.xpose.msra.mxu0 0
    %479 = vmatprep.subr.bf16.mxu0 0
    %480 = vmatpush1.bf16.xpose.msra.mxu0 0
    %481 = vmatprep.subr.bf16.mxu0 0
    %482 = vmatpush1.bf16.xpose.msra.mxu0 0
    %483 = vmatprep.subr.bf16.mxu0 0
    %484 = vmatpush1.bf16.xpose.msra.mxu0 0
    %485 = vmatprep.subr.bf16.mxu0 0
    %486 = vmatpush1.bf16.xpose.msra.mxu0 0
    %487 = vmatprep.subr.bf16.mxu0 0
    %488 = vmatpush1.bf16.xpose.msra.mxu0 0
    %489 = vmatprep.subr.bf16.mxu0 0
    %490 = vmatpush1.bf16.xpose.msra.mxu0 0
    %491 = vmatprep.subr.bf16.mxu0 0
    %492 = vmatpush1.bf16.xpose.msra.mxu0 0
    %493 = vmatprep.subr.bf16.mxu0 0
    %494 = vmatpush1.bf16.xpose.msra.mxu0 0
    %495 = vmatprep.subr.bf16.mxu0 0
    %496 = vmatpush1.bf16.xpose.msra.mxu0 0
    %497 = vmatprep.subr.bf16.mxu0 0
    %498 = vmatpush1.bf16.xpose.msra.mxu0 0
    %499 = vmatprep.subr.bf16.mxu0 0
    %500 = vmatpush1.bf16.xpose.msra.mxu0 0
    %501 = vmatprep.subr.bf16.mxu0 0
    %502 = vmatpush1.bf16.xpose.msra.mxu0 0
    %503 = vmatprep.mubr.bf16.mxu0 0
    %504 = vmatmul.mubr.bf16.gmra.mrb[0].mxu0 %v466
    %v505 = vpop.f32.mrb[0].mxu0
    %v506 = vadd.f32 0.0, %v505
    %v507 = vpop.f32.mrb[0].mxu0
    %v508 = vpop.f32.mrb[0].mxu0
    %v509 = vpop.f32.mrb[0].mxu0
    %510 = vdwg.mxu0
    %511 = vrot.lane.b32.xlu0 %v240, 120
    %v512 = vpop.permute.xlu0 %511
    %513 = vrot.lane.b32.xlu0 %v240, 88
    %v514 = vpop.permute.xlu0 %513
    %v516 = vsel %vm243, %v512, 0
    %v519 = vsel %vm243, %v514, 0
    %521 = vmatprep.subr.bf16.mxu0 0
    %522 = vmatpush1.bf16.xpose.msra.mxu0 %v519
    %523 = vmatprep.subr.bf16.mxu0 0
    %524 = vmatpush1.bf16.xpose.msra.mxu0 0
    %525 = vmatprep.subr.bf16.mxu0 0
    %526 = vmatpush1.bf16.xpose.msra.mxu0 0
    %527 = vmatprep.subr.bf16.mxu0 0
    %528 = vmatpush1.bf16.xpose.msra.mxu0 0
    %529 = vmatprep.subr.bf16.mxu0 0
    %530 = vmatpush1.bf16.xpose.msra.mxu0 0
    %531 = vmatprep.subr.bf16.mxu0 0
    %532 = vmatpush1.bf16.xpose.msra.mxu0 0
    %533 = vmatprep.subr.bf16.mxu0 0
    %534 = vmatpush1.bf16.xpose.msra.mxu0 0
    %535 = vmatprep.subr.bf16.mxu0 0
    %536 = vmatpush1.bf16.xpose.msra.mxu0 0
    %537 = vmatprep.subr.bf16.mxu0 0
    %538 = vmatpush1.bf16.xpose.msra.mxu0 0
    %539 = vmatprep.subr.bf16.mxu0 0
    %540 = vmatpush1.bf16.xpose.msra.mxu0 0
    %541 = vmatprep.subr.bf16.mxu0 0
    %542 = vmatpush1.bf16.xpose.msra.mxu0 0
    %543 = vmatprep.subr.bf16.mxu0 0
    %544 = vmatpush1.bf16.xpose.msra.mxu0 0
    %545 = vmatprep.subr.bf16.mxu0 0
    %546 = vmatpush1.bf16.xpose.msra.mxu0 0
    %547 = vmatprep.subr.bf16.mxu0 0
    %548 = vmatpush1.bf16.xpose.msra.mxu0 0
    %549 = vmatprep.subr.bf16.mxu0 0
    %550 = vmatpush1.bf16.xpose.msra.mxu0 0
    %551 = vmatprep.subr.bf16.mxu0 0
    %552 = vmatpush1.bf16.xpose.msra.mxu0 0
    %553 = vmatprep.mubr.bf16.mxu0 0
    %554 = vmatmul.mubr.bf16.gmra.mrb[0].mxu0 %v516
    %v555 = vpop.f32.mrb[0].mxu0
    %v556 = vadd.f32 0.0, %v555
    %v557 = vpop.f32.mrb[0].mxu0
    %v558 = vpop.f32.mrb[0].mxu0
    %v559 = vpop.f32.mrb[0].mxu0
    %560 = vdwg.mxu0
    %v561 = vmul.f32 %v506, 0.35355338
    %v562 = vmul.f32 %v556, 0.35355338
    %v563 = vsel %vm243, %v561, -inf
    %564 = vmax.xlane.f32.xlu0 %v563
    %v565 = vpop.xlane.xlu0 %564
    %v566 = vsel %vm243, %v562, -inf
    %567 = vmax.xlane.f32.xlu0 %v566
    %v568 = vpop.xlane.xlu0 %567
    %v569 = vsub.f32 %v561, %v565
    %v570 = vsub.f32 %v562, %v568
    %v571 = vmul.f32 %v569, 1.442695
    %v572 = vpow.pop %v571
    %v573 = vmul.f32 %v570, 1.442695
    %v574 = vpow.pop %v573
    %v575 = vsel %vm243, %v572, 0.0
    %576 = vadd.xlane.f32.xlu0 %v575
    %v577 = vpop.xlane.xlu0 %576
    %v578 = vsel %vm243, %v574, 0.0
    %579 = vadd.xlane.f32.xlu0 %v578
    %v580 = vpop.xlane.xlu0 %579
    %v581 = vrcp.pop %v577
    %v582 = vrcp.pop %v580
    %v583 = vmul.f32 %v572, %v581
    %v584 = vmul.f32 %v574, %v582
    %v585 = vpack.c.bf16 %v583, %v583
    %v586 = vpack.c.bf16 %v584, %v584
    %587 = vrot.lane.b32.xlu0 %v239, 56
    %v588 = vpop.permute.xlu0 %587
    %v590 = vsel %vm243, %v585, 0
    %v593 = vsel %vm369, %v588, 0
    %595 = vmatprep.subr.bf16.mxu0 0
    %596 = vmatpush1.bf16.msra.mxu0 %v593
    %597 = vmatprep.subr.bf16.mxu0 0
    %598 = vmatpush1.bf16.msra.mxu0 0
    %599 = vmatprep.subr.bf16.mxu0 0
    %600 = vmatpush1.bf16.msra.mxu0 0
    %601 = vmatprep.subr.bf16.mxu0 0
    %602 = vmatpush1.bf16.msra.mxu0 0
    %603 = vmatprep.subr.bf16.mxu0 0
    %604 = vmatpush1.bf16.msra.mxu0 0
    %605 = vmatprep.subr.bf16.mxu0 0
    %606 = vmatpush1.bf16.msra.mxu0 0
    %607 = vmatprep.subr.bf16.mxu0 0
    %608 = vmatpush1.bf16.msra.mxu0 0
    %609 = vmatprep.subr.bf16.mxu0 0
    %610 = vmatpush1.bf16.msra.mxu0 0
    %611 = vmatprep.subr.bf16.mxu0 0
    %612 = vmatpush1.bf16.msra.mxu0 0
    %613 = vmatprep.subr.bf16.mxu0 0
    %614 = vmatpush1.bf16.msra.mxu0 0
    %615 = vmatprep.subr.bf16.mxu0 0
    %616 = vmatpush1.bf16.msra.mxu0 0
    %617 = vmatprep.subr.bf16.mxu0 0
    %618 = vmatpush1.bf16.msra.mxu0 0
    %619 = vmatprep.subr.bf16.mxu0 0
    %620 = vmatpush1.bf16.msra.mxu0 0
    %621 = vmatprep.subr.bf16.mxu0 0
    %622 = vmatpush1.bf16.msra.mxu0 0
    %623 = vmatprep.subr.bf16.mxu0 0
    %624 = vmatpush1.bf16.msra.mxu0 0
    %625 = vmatprep.subr.bf16.mxu0 0
    %626 = vmatpush1.bf16.msra.mxu0 0
    %627 = vmatprep.mubr.bf16.mxu0 0
    %628 = vmatmul.mubr.bf16.gmra.mrb[0].mxu0 %v590
    %v629 = vpop.f32.mrb[0].mxu0
    %v630 = vadd.f32 0.0, %v629
    %v631 = vpop.f32.mrb[0].mxu0
    %v632 = vpop.f32.mrb[0].mxu0
    %v633 = vpop.f32.mrb[0].mxu0
    %634 = vdwg.mxu0
    %635 = vrot.lane.b32.xlu0 %v240, 56
    %v636 = vpop.permute.xlu0 %635
    %v638 = vsel %vm243, %v586, 0
    %v641 = vsel %vm369, %v636, 0
    %643 = vmatprep.subr.bf16.mxu0 0
    %644 = vmatpush1.bf16.msra.mxu0 %v641
    %645 = vmatprep.subr.bf16.mxu0 0
    %646 = vmatpush1.bf16.msra.mxu0 0
    %647 = vmatprep.subr.bf16.mxu0 0
    %648 = vmatpush1.bf16.msra.mxu0 0
    %649 = vmatprep.subr.bf16.mxu0 0
    %650 = vmatpush1.bf16.msra.mxu0 0
    %651 = vmatprep.subr.bf16.mxu0 0
    %652 = vmatpush1.bf16.msra.mxu0 0
    %653 = vmatprep.subr.bf16.mxu0 0
    %654 = vmatpush1.bf16.msra.mxu0 0
    %655 = vmatprep.subr.bf16.mxu0 0
    %656 = vmatpush1.bf16.msra.mxu0 0
    %657 = vmatprep.subr.bf16.mxu0 0
    %658 = vmatpush1.bf16.msra.mxu0 0
    %659 = vmatprep.subr.bf16.mxu0 0
    %660 = vmatpush1.bf16.msra.mxu0 0
    %661 = vmatprep.subr.bf16.mxu0 0
    %662 = vmatpush1.bf16.msra.mxu0 0
    %663 = vmatprep.subr.bf16.mxu0 0
    %664 = vmatpush1.bf16.msra.mxu0 0
    %665 = vmatprep.subr.bf16.mxu0 0
    %666 = vmatpush1.bf16.msra.mxu0 0
    %667 = vmatprep.subr.bf16.mxu0 0
    %668 = vmatpush1.bf16.msra.mxu0 0
    %669 = vmatprep.subr.bf16.mxu0 0
    %670 = vmatpush1.bf16.msra.mxu0 0
    %671 = vmatprep.subr.bf16.mxu0 0
    %672 = vmatpush1.bf16.msra.mxu0 0
    %673 = vmatprep.subr.bf16.mxu0 0
    %674 = vmatpush1.bf16.msra.mxu0 0
    %675 = vmatprep.mubr.bf16.mxu0 0
    %676 = vmatmul.mubr.bf16.gmra.mrb[0].mxu0 %v638
    %v677 = vpop.f32.mrb[0].mxu0
    %v678 = vadd.f32 0.0, %v677
    %v679 = vpop.f32.mrb[0].mxu0
    %v680 = vpop.f32.mrb[0].mxu0
    %v681 = vpop.f32.mrb[0].mxu0
    %682 = vdwg.mxu0
    %683 = vrot.lane.b32.xlu0 %v239, 112
    %v684 = vpop.permute.xlu0 %683
    %685 = vrot.lane.b32.xlu0 %v239, 80
    %v686 = vpop.permute.xlu0 %685
    %v688 = vsel %vm243, %v684, 0
    %v691 = vsel %vm243, %v686, 0
    %693 = vmatprep.subr.bf16.mxu0 0
    %694 = vmatpush1.bf16.xpose.msra.mxu0 %v691
    %695 = vmatprep.subr.bf16.mxu0 0
    %696 = vmatpush1.bf16.xpose.msra.mxu0 0
    %697 = vmatprep.subr.bf16.mxu0 0
    %698 = vmatpush1.bf16.xpose.msra.mxu0 0
    %699 = vmatprep.subr.bf16.mxu0 0
    %700 = vmatpush1.bf16.xpose.msra.mxu0 0
    %701 = vmatprep.subr.bf16.mxu0 0
    %702 = vmatpush1.bf16.xpose.msra.mxu0 0
    %703 = vmatprep.subr.bf16.mxu0 0
    %704 = vmatpush1.bf16.xpose.msra.mxu0 0
    %705 = vmatprep.subr.bf16.mxu0 0
    %706 = vmatpush1.bf16.xpose.msra.mxu0 0
    %707 = vmatprep.subr.bf16.mxu0 0
    %708 = vmatpush1.bf16.xpose.msra.mxu0 0
    %709 = vmatprep.subr.bf16.mxu0 0
    %710 = vmatpush1.bf16.xpose.msra.mxu0 0
    %711 = vmatprep.subr.bf16.mxu0 0
    %712 = vmatpush1.bf16.xpose.msra.mxu0 0
    %713 = vmatprep.subr.bf16.mxu0 0
    %714 = vmatpush1.bf16.xpose.msra.mxu0 0
    %715 = vmatprep.subr.bf16.mxu0 0
    %716 = vmatpush1.bf16.xpose.msra.mxu0 0
    %717 = vmatprep.subr.bf16.mxu0 0
    %718 = vmatpush1.bf16.xpose.msra.mxu0 0
    %719 = vmatprep.subr.bf16.mxu0 0
    %720 = vmatpush1.bf16.xpose.msra.mxu0 0
    %721 = vmatprep.subr.bf16.mxu0 0
    %722 = vmatpush1.bf16.xpose.msra.mxu0 0
    %723 = vmatprep.subr.bf16.mxu0 0
    %724 = vmatpush1.bf16.xpose.msra.mxu0 0
    %725 = vmatprep.mubr.bf16.mxu0 0
    %726 = vmatmul.mubr.bf16.gmra.mrb[0].mxu0 %v688
    %v727 = vpop.f32.mrb[0].mxu0
    %v728 = vadd.f32 0.0, %v727
    %v729 = vpop.f32.mrb[0].mxu0
    %v730 = vpop.f32.mrb[0].mxu0
    %v731 = vpop.f32.mrb[0].mxu0
    %732 = vdwg.mxu0
    %733 = vrot.lane.b32.xlu0 %v240, 112
    %v734 = vpop.permute.xlu0 %733
    %735 = vrot.lane.b32.xlu0 %v240, 80
    %v736 = vpop.permute.xlu0 %735
    %v738 = vsel %vm243, %v734, 0
    %v741 = vsel %vm243, %v736, 0
    %743 = vmatprep.subr.bf16.mxu0 0
    %744 = vmatpush1.bf16.xpose.msra.mxu0 %v741
    %745 = vmatprep.subr.bf16.mxu0 0
    %746 = vmatpush1.bf16.xpose.msra.mxu0 0
    %747 = vmatprep.subr.bf16.mxu0 0
    %748 = vmatpush1.bf16.xpose.msra.mxu0 0
    %749 = vmatprep.subr.bf16.mxu0 0
    %750 = vmatpush1.bf16.xpose.msra.mxu0 0
    %751 = vmatprep.subr.bf16.mxu0 0
    %752 = vmatpush1.bf16.xpose.msra.mxu0 0
    %753 = vmatprep.subr.bf16.mxu0 0
    %754 = vmatpush1.bf16.xpose.msra.mxu0 0
    %755 = vmatprep.subr.bf16.mxu0 0
    %756 = vmatpush1.bf16.xpose.msra.mxu0 0
    %757 = vmatprep.subr.bf16.mxu0 0
    %758 = vmatpush1.bf16.xpose.msra.mxu0 0
    %759 = vmatprep.subr.bf16.mxu0 0
    %760 = vmatpush1.bf16.xpose.msra.mxu0 0
    %761 = vmatprep.subr.bf16.mxu0 0
    %762 = vmatpush1.bf16.xpose.msra.mxu0 0
    %763 = vmatprep.subr.bf16.mxu0 0
    %764 = vmatpush1.bf16.xpose.msra.mxu0 0
    %765 = vmatprep.subr.bf16.mxu0 0
    %766 = vmatpush1.bf16.xpose.msra.mxu0 0
    %767 = vmatprep.subr.bf16.mxu0 0
    %768 = vmatpush1.bf16.xpose.msra.mxu0 0
    %769 = vmatprep.subr.bf16.mxu0 0
    %770 = vmatpush1.bf16.xpose.msra.mxu0 0
    %771 = vmatprep.subr.bf16.mxu0 0
    %772 = vmatpush1.bf16.xpose.msra.mxu0 0
    %773 = vmatprep.subr.bf16.mxu0 0
    %774 = vmatpush1.bf16.xpose.msra.mxu0 0
    %775 = vmatprep.mubr.bf16.mxu0 0
    %776 = vmatmul.mubr.bf16.gmra.mrb[0].mxu0 %v738
    %v777 = vpop.f32.mrb[0].mxu0
    %v778 = vadd.f32 0.0, %v777
    %v779 = vpop.f32.mrb[0].mxu0
    %v780 = vpop.f32.mrb[0].mxu0
    %v781 = vpop.f32.mrb[0].mxu0
    %782 = vdwg.mxu0
    %v783 = vmul.f32 %v728, 0.35355338
    %v784 = vmul.f32 %v778, 0.35355338
    %v785 = vsel %vm243, %v783, -inf
    %786 = vmax.xlane.f32.xlu0 %v785
    %v787 = vpop.xlane.xlu0 %786
    %v788 = vsel %vm243, %v784, -inf
    %789 = vmax.xlane.f32.xlu0 %v788
    %v790 = vpop.xlane.xlu0 %789
    %v791 = vsub.f32 %v783, %v787
    %v792 = vsub.f32 %v784, %v790
    %v793 = vmul.f32 %v791, 1.442695
    %v794 = vpow.pop %v793
    %v795 = vmul.f32 %v792, 1.442695
    %v796 = vpow.pop %v795
    %v797 = vsel %vm243, %v794, 0.0
    %798 = vadd.xlane.f32.xlu0 %v797
    %v799 = vpop.xlane.xlu0 %798
    %v800 = vsel %vm243, %v796, 0.0
    %801 = vadd.xlane.f32.xlu0 %v800
    %v802 = vpop.xlane.xlu0 %801
    %v803 = vrcp.pop %v799
    %v804 = vrcp.pop %v802
    %v805 = vmul.f32 %v794, %v803
    %v806 = vmul.f32 %v796, %v804
    %v807 = vpack.c.bf16 %v805, %v805
    %v808 = vpack.c.bf16 %v806, %v806
    %809 = vrot.lane.b32.xlu0 %v239, 48
    %v810 = vpop.permute.xlu0 %809
    %v812 = vsel %vm243, %v807, 0
    %v815 = vsel %vm369, %v810, 0
    %817 = vmatprep.subr.bf16.mxu0 0
    %818 = vmatpush1.bf16.msra.mxu0 %v815
    %819 = vmatprep.subr.bf16.mxu0 0
    %820 = vmatpush1.bf16.msra.mxu0 0
    %821 = vmatprep.subr.bf16.mxu0 0
    %822 = vmatpush1.bf16.msra.mxu0 0
    %823 = vmatprep.subr.bf16.mxu0 0
    %824 = vmatpush1.bf16.msra.mxu0 0
    %825 = vmatprep.subr.bf16.mxu0 0
    %826 = vmatpush1.bf16.msra.mxu0 0
    %827 = vmatprep.subr.bf16.mxu0 0
    %828 = vmatpush1.bf16.msra.mxu0 0
    %829 = vmatprep.subr.bf16.mxu0 0
    %830 = vmatpush1.bf16.msra.mxu0 0
    %831 = vmatprep.subr.bf16.mxu0 0
    %832 = vmatpush1.bf16.msra.mxu0 0
    %833 = vmatprep.subr.bf16.mxu0 0
    %834 = vmatpush1.bf16.msra.mxu0 0
    %835 = vmatprep.subr.bf16.mxu0 0
    %836 = vmatpush1.bf16.msra.mxu0 0
    %837 = vmatprep.subr.bf16.mxu0 0
    %838 = vmatpush1.bf16.msra.mxu0 0
    %839 = vmatprep.subr.bf16.mxu0 0
    %840 = vmatpush1.bf16.msra.mxu0 0
    %841 = vmatprep.subr.bf16.mxu0 0
    %842 = vmatpush1.bf16.msra.mxu0 0
    %843 = vmatprep.subr.bf16.mxu0 0
    %844 = vmatpush1.bf16.msra.mxu0 0
    %845 = vmatprep.subr.bf16.mxu0 0
    %846 = vmatpush1.bf16.msra.mxu0 0
    %847 = vmatprep.subr.bf16.mxu0 0
    %848 = vmatpush1.bf16.msra.mxu0 0
    %849 = vmatprep.mubr.bf16.mxu0 0
    %850 = vmatmul.mubr.bf16.gmra.mrb[0].mxu0 %v812
    %v851 = vpop.f32.mrb[0].mxu0
    %v852 = vadd.f32 0.0, %v851
    %v853 = vpop.f32.mrb[0].mxu0
    %v854 = vpop.f32.mrb[0].mxu0
    %v855 = vpop.f32.mrb[0].mxu0
    %856 = vdwg.mxu0
    %857 = vrot.lane.b32.xlu0 %v240, 48
    %v858 = vpop.permute.xlu0 %857
    %v860 = vsel %vm243, %v808, 0
    %v863 = vsel %vm369, %v858, 0
    %865 = vmatprep.subr.bf16.mxu0 0
    %866 = vmatpush1.bf16.msra.mxu0 %v863
    %867 = vmatprep.subr.bf16.mxu0 0
    %868 = vmatpush1.bf16.msra.mxu0 0
    %869 = vmatprep.subr.bf16.mxu0 0
    %870 = vmatpush1.bf16.msra.mxu0 0
    %871 = vmatprep.subr.bf16.mxu0 0
    %872 = vmatpush1.bf16.msra.mxu0 0
    %873 = vmatprep.subr.bf16.mxu0 0
    %874 = vmatpush1.bf16.msra.mxu0 0
    %875 = vmatprep.subr.bf16.mxu0 0
    %876 = vmatpush1.bf16.msra.mxu0 0
    %877 = vmatprep.subr.bf16.mxu0 0
    %878 = vmatpush1.bf16.msra.mxu0 0
    %879 = vmatprep.subr.bf16.mxu0 0
    %880 = vmatpush1.bf16.msra.mxu0 0
    %881 = vmatprep.subr.bf16.mxu0 0
    %882 = vmatpush1.bf16.msra.mxu0 0
    %883 = vmatprep.subr.bf16.mxu0 0
    %884 = vmatpush1.bf16.msra.mxu0 0
    %885 = vmatprep.subr.bf16.mxu0 0
    %886 = vmatpush1.bf16.msra.mxu0 0
    %887 = vmatprep.subr.bf16.mxu0 0
    %888 = vmatpush1.bf16.msra.mxu0 0
    %889 = vmatprep.subr.bf16.mxu0 0
    %890 = vmatpush1.bf16.msra.mxu0 0
    %891 = vmatprep.subr.bf16.mxu0 0
    %892 = vmatpush1.bf16.msra.mxu0 0
    %893 = vmatprep.subr.bf16.mxu0 0
    %894 = vmatpush1.bf16.msra.mxu0 0
    %895 = vmatprep.subr.bf16.mxu0 0
    %896 = vmatpush1.bf16.msra.mxu0 0
    %897 = vmatprep.mubr.bf16.mxu0 0
    %898 = vmatmul.mubr.bf16.gmra.mrb[0].mxu0 %v860
    %v899 = vpop.f32.mrb[0].mxu0
    %v900 = vadd.f32 0.0, %v899
    %v901 = vpop.f32.mrb[0].mxu0
    %v902 = vpop.f32.mrb[0].mxu0
    %v903 = vpop.f32.mrb[0].mxu0
    %904 = vdwg.mxu0
    %905 = vrot.lane.b32.xlu0 %v239, 104
    %v906 = vpop.permute.xlu0 %905
    %907 = vrot.lane.b32.xlu0 %v239, 72
    %v908 = vpop.permute.xlu0 %907
    %v910 = vsel %vm243, %v906, 0
    %v913 = vsel %vm243, %v908, 0
    %915 = vmatprep.subr.bf16.mxu0 0
    %916 = vmatpush1.bf16.xpose.msra.mxu0 %v913
    %917 = vmatprep.subr.bf16.mxu0 0
    %918 = vmatpush1.bf16.xpose.msra.mxu0 0
    %919 = vmatprep.subr.bf16.mxu0 0
    %920 = vmatpush1.bf16.xpose.msra.mxu0 0
    %921 = vmatprep.subr.bf16.mxu0 0
    %922 = vmatpush1.bf16.xpose.msra.mxu0 0
    %923 = vmatprep.subr.bf16.mxu0 0
    %924 = vmatpush1.bf16.xpose.msra.mxu0 0
    %925 = vmatprep.subr.bf16.mxu0 0
    %926 = vmatpush1.bf16.xpose.msra.mxu0 0
    %927 = vmatprep.subr.bf16.mxu0 0
    %928 = vmatpush1.bf16.xpose.msra.mxu0 0
    %929 = vmatprep.subr.bf16.mxu0 0
    %930 = vmatpush1.bf16.xpose.msra.mxu0 0
    %931 = vmatprep.subr.bf16.mxu0 0
    %932 = vmatpush1.bf16.xpose.msra.mxu0 0
    %933 = vmatprep.subr.bf16.mxu0 0
    %934 = vmatpush1.bf16.xpose.msra.mxu0 0
    %935 = vmatprep.subr.bf16.mxu0 0
    %936 = vmatpush1.bf16.xpose.msra.mxu0 0
    %937 = vmatprep.subr.bf16.mxu0 0
    %938 = vmatpush1.bf16.xpose.msra.mxu0 0
    %939 = vmatprep.subr.bf16.mxu0 0
    %940 = vmatpush1.bf16.xpose.msra.mxu0 0
    %941 = vmatprep.subr.bf16.mxu0 0
    %942 = vmatpush1.bf16.xpose.msra.mxu0 0
    %943 = vmatprep.subr.bf16.mxu0 0
    %944 = vmatpush1.bf16.xpose.msra.mxu0 0
    %945 = vmatprep.subr.bf16.mxu0 0
    %946 = vmatpush1.bf16.xpose.msra.mxu0 0
    %947 = vmatprep.mubr.bf16.mxu0 0
    %948 = vmatmul.mubr.bf16.gmra.mrb[0].mxu0 %v910
    %v949 = vpop.f32.mrb[0].mxu0
    %v950 = vadd.f32 0.0, %v949
    %v951 = vpop.f32.mrb[0].mxu0
    %v952 = vpop.f32.mrb[0].mxu0
    %v953 = vpop.f32.mrb[0].mxu0
    %954 = vdwg.mxu0
    %955 = vrot.lane.b32.xlu0 %v240, 104
    %v956 = vpop.permute.xlu0 %955
    %957 = vrot.lane.b32.xlu0 %v240, 72
    %v958 = vpop.permute.xlu0 %957
    %v960 = vsel %vm243, %v956, 0
    %v963 = vsel %vm243, %v958, 0
    %965 = vmatprep.subr.bf16.mxu0 0
    %966 = vmatpush1.bf16.xpose.msra.mxu0 %v963
    %967 = vmatprep.subr.bf16.mxu0 0
    %968 = vmatpush1.bf16.xpose.msra.mxu0 0
    %969 = vmatprep.subr.bf16.mxu0 0
    %970 = vmatpush1.bf16.xpose.msra.mxu0 0
    %971 = vmatprep.subr.bf16.mxu0 0
    %972 = vmatpush1.bf16.xpose.msra.mxu0 0
    %973 = vmatprep.subr.bf16.mxu0 0
    %974 = vmatpush1.bf16.xpose.msra.mxu0 0
    %975 = vmatprep.subr.bf16.mxu0 0
    %976 = vmatpush1.bf16.xpose.msra.mxu0 0
    %977 = vmatprep.subr.bf16.mxu0 0
    %978 = vmatpush1.bf16.xpose.msra.mxu0 0
    %979 = vmatprep.subr.bf16.mxu0 0
    %980 = vmatpush1.bf16.xpose.msra.mxu0 0
    %981 = vmatprep.subr.bf16.mxu0 0
    %982 = vmatpush1.bf16.xpose.msra.mxu0 0
    %983 = vmatprep.subr.bf16.mxu0 0
    %984 = vmatpush1.bf16.xpose.msra.mxu0 0
    %985 = vmatprep.subr.bf16.mxu0 0
    %986 = vmatpush1.bf16.xpose.msra.mxu0 0
    %987 = vmatprep.subr.bf16.mxu0 0
    %988 = vmatpush1.bf16.xpose.msra.mxu0 0
    %989 = vmatprep.subr.bf16.mxu0 0
    %990 = vmatpush1.bf16.xpose.msra.mxu0 0
    %991 = vmatprep.subr.bf16.mxu0 0
    %992 = vmatpush1.bf16.xpose.msra.mxu0 0
    %993 = vmatprep.subr.bf16.mxu0 0
    %994 = vmatpush1.bf16.xpose.msra.mxu0 0
    %995 = vmatprep.subr.bf16.mxu0 0
    %996 = vmatpush1.bf16.xpose.msra.mxu0 0
    %997 = vmatprep.mubr.bf16.mxu0 0
    %998 = vmatmul.mubr.bf16.gmra.mrb[0].mxu0 %v960
    %v999 = vpop.f32.mrb[0].mxu0
    %v1000 = vadd.f32 0.0, %v999
    %v1001 = vpop.f32.mrb[0].mxu0
    %v1002 = vpop.f32.mrb[0].mxu0
    %v1003 = vpop.f32.mrb[0].mxu0
    %1004 = vdwg.mxu0
    %v1005 = vmul.f32 %v950, 0.35355338
    %v1006 = vmul.f32 %v1000, 0.35355338
    %v1007 = vsel %vm243, %v1005, -inf
    %1008 = vmax.xlane.f32.xlu0 %v1007
    %v1009 = vpop.xlane.xlu0 %1008
    %v1010 = vsel %vm243, %v1006, -inf
    %1011 = vmax.xlane.f32.xlu0 %v1010
    %v1012 = vpop.xlane.xlu0 %1011
    %v1013 = vsub.f32 %v1005, %v1009
    %v1014 = vsub.f32 %v1006, %v1012
    %v1015 = vmul.f32 %v1013, 1.442695
    %v1016 = vpow.pop %v1015
    %v1017 = vmul.f32 %v1014, 1.442695
    %v1018 = vpow.pop %v1017
    %v1019 = vsel %vm243, %v1016, 0.0
    %1020 = vadd.xlane.f32.xlu0 %v1019
    %v1021 = vpop.xlane.xlu0 %1020
    %v1022 = vsel %vm243, %v1018, 0.0
    %1023 = vadd.xlane.f32.xlu0 %v1022
    %v1024 = vpop.xlane.xlu0 %1023
    %v1025 = vrcp.pop %v1021
    %v1026 = vrcp.pop %v1024
    %v1027 = vmul.f32 %v1016, %v1025
    %v1028 = vmul.f32 %v1018, %v1026
    %v1029 = vpack.c.bf16 %v1027, %v1027
    %v1030 = vpack.c.bf16 %v1028, %v1028
    %1031 = vrot.lane.b32.xlu0 %v239, 40
    %v1032 = vpop.permute.xlu0 %1031
    %v1034 = vsel %vm243, %v1029, 0
    %v1037 = vsel %vm369, %v1032, 0
    %1039 = vmatprep.subr.bf16.mxu0 0
    %1040 = vmatpush1.bf16.msra.mxu0 %v1037
    %1041 = vmatprep.subr.bf16.mxu0 0
    %1042 = vmatpush1.bf16.msra.mxu0 0
    %1043 = vmatprep.subr.bf16.mxu0 0
    %1044 = vmatpush1.bf16.msra.mxu0 0
    %1045 = vmatprep.subr.bf16.mxu0 0
    %1046 = vmatpush1.bf16.msra.mxu0 0
    %1047 = vmatprep.subr.bf16.mxu0 0
    %1048 = vmatpush1.bf16.msra.mxu0 0
    %1049 = vmatprep.subr.bf16.mxu0 0
    %1050 = vmatpush1.bf16.msra.mxu0 0
    %1051 = vmatprep.subr.bf16.mxu0 0
    %1052 = vmatpush1.bf16.msra.mxu0 0
    %1053 = vmatprep.subr.bf16.mxu0 0
    %1054 = vmatpush1.bf16.msra.mxu0 0
    %1055 = vmatprep.subr.bf16.mxu0 0
    %1056 = vmatpush1.bf16.msra.mxu0 0
    %1057 = vmatprep.subr.bf16.mxu0 0
    %1058 = vmatpush1.bf16.msra.mxu0 0
    %1059 = vmatprep.subr.bf16.mxu0 0
    %1060 = vmatpush1.bf16.msra.mxu0 0
    %1061 = vmatprep.subr.bf16.mxu0 0
    %1062 = vmatpush1.bf16.msra.mxu0 0
    %1063 = vmatprep.subr.bf16.mxu0 0
    %1064 = vmatpush1.bf16.msra.mxu0 0
    %1065 = vmatprep.subr.bf16.mxu0 0
    %1066 = vmatpush1.bf16.msra.mxu0 0
    %1067 = vmatprep.subr.bf16.mxu0 0
    %1068 = vmatpush1.bf16.msra.mxu0 0
    %1069 = vmatprep.subr.bf16.mxu0 0
    %1070 = vmatpush1.bf16.msra.mxu0 0
    %1071 = vmatprep.mubr.bf16.mxu0 0
    %1072 = vmatmul.mubr.bf16.gmra.mrb[0].mxu0 %v1034
    %v1073 = vpop.f32.mrb[0].mxu0
    %v1074 = vadd.f32 0.0, %v1073
    %v1075 = vpop.f32.mrb[0].mxu0
    %v1076 = vpop.f32.mrb[0].mxu0
    %v1077 = vpop.f32.mrb[0].mxu0
    %1078 = vdwg.mxu0
    %1079 = vrot.lane.b32.xlu0 %v240, 40
    %v1080 = vpop.permute.xlu0 %1079
    %v1082 = vsel %vm243, %v1030, 0
    %v1085 = vsel %vm369, %v1080, 0
    %1087 = vmatprep.subr.bf16.mxu0 0
    %1088 = vmatpush1.bf16.msra.mxu0 %v1085
    %1089 = vmatprep.subr.bf16.mxu0 0
    %1090 = vmatpush1.bf16.msra.mxu0 0
    %1091 = vmatprep.subr.bf16.mxu0 0
    %1092 = vmatpush1.bf16.msra.mxu0 0
    %1093 = vmatprep.subr.bf16.mxu0 0
    %1094 = vmatpush1.bf16.msra.mxu0 0
    %1095 = vmatprep.subr.bf16.mxu0 0
    %1096 = vmatpush1.bf16.msra.mxu0 0
    %1097 = vmatprep.subr.bf16.mxu0 0
    %1098 = vmatpush1.bf16.msra.mxu0 0
    %1099 = vmatprep.subr.bf16.mxu0 0
    %1100 = vmatpush1.bf16.msra.mxu0 0
    %1101 = vmatprep.subr.bf16.mxu0 0
    %1102 = vmatpush1.bf16.msra.mxu0 0
    %1103 = vmatprep.subr.bf16.mxu0 0
    %1104 = vmatpush1.bf16.msra.mxu0 0
    %1105 = vmatprep.subr.bf16.mxu0 0
    %1106 = vmatpush1.bf16.msra.mxu0 0
    %1107 = vmatprep.subr.bf16.mxu0 0
    %1108 = vmatpush1.bf16.msra.mxu0 0
    %1109 = vmatprep.subr.bf16.mxu0 0
    %1110 = vmatpush1.bf16.msra.mxu0 0
    %1111 = vmatprep.subr.bf16.mxu0 0
    %1112 = vmatpush1.bf16.msra.mxu0 0
    %1113 = vmatprep.subr.bf16.mxu0 0
    %1114 = vmatpush1.bf16.msra.mxu0 0
    %1115 = vmatprep.subr.bf16.mxu0 0
    %1116 = vmatpush1.bf16.msra.mxu0 0
    %1117 = vmatprep.subr.bf16.mxu0 0
    %1118 = vmatpush1.bf16.msra.mxu0 0
    %1119 = vmatprep.mubr.bf16.mxu0 0
    %1120 = vmatmul.mubr.bf16.gmra.mrb[0].mxu0 %v1082
    %v1121 = vpop.f32.mrb[0].mxu0
    %v1122 = vadd.f32 0.0, %v1121
    %v1123 = vpop.f32.mrb[0].mxu0
    %v1124 = vpop.f32.mrb[0].mxu0
    %v1125 = vpop.f32.mrb[0].mxu0
    %1126 = vdwg.mxu0
    %1129 = vrot.lane.b32.xlu0 %v630, 8
    %v1130 = vpop.permute.xlu0 %1129
    %1131 = vrot.lane.b32.xlu0 %v678, 8
    %v1132 = vpop.permute.xlu0 %1131
    %1137 = vrot.lane.b32.xlu0 %v852, 16
    %v1138 = vpop.permute.xlu0 %1137
    %1139 = vrot.lane.b32.xlu0 %v900, 16
    %v1140 = vpop.permute.xlu0 %1139
    %1145 = vrot.lane.b32.xlu0 %v1074, 24
    %v1146 = vpop.permute.xlu0 %1145
    %1147 = vrot.lane.b32.xlu0 %v1122, 24
    %v1148 = vpop.permute.xlu0 %1147
    %v1151 = vsel %vm243, %v408, %v1130
    %v1152 = vsel %vm243, %v456, %v1132
    %vm1153 = vcmask 130048
    %v1154 = vsel %vm1153, %v1151, %v1138
    %v1155 = vsel %vm1153, %v1152, %v1140
    %vm1156 = vcmask 195584
    %v1157 = vsel %vm1156, %v1154, %v1146
    %v1158 = vsel %vm1156, %v1155, %v1148
    %v1159 = vpack.c.bf16 %v1158, %v1157
    %v1160 = vlaneseq
    %v1161 = vshrl.u32 %v1160, 7
    %v1162 = vsub.s32 1, %v1161
    %v1163 = vrot.slane %v133, %v1162
    %v1164 = vunpack.c.h.b16 %v125
    %v1165 = vunpack.c.h.b16 %v127
    %v1166 = vunpack.c.h.b16 %v129
    %v1167 = vunpack.c.h.b16 %v131
    %v1168 = vpack.c.b16 %v1165, %v1164
    %v1169 = vpack.c.b16 %v1167, %v1166
    %v1173 = vsel %vm134, %v1159, 0
    %1175 = vmatprep.subr.bf16.mxu0 0
    %1176 = vmatpush1.bf16.msra.mxu0 %v1168
    %1177 = vmatprep.subr.bf16.mxu0 0
    %1178 = vmatpush1.bf16.msra.mxu0 %v1169
    %1179 = vmatprep.subr.bf16.mxu0 0
    %1180 = vmatpush1.bf16.msra.mxu0 0
    %1181 = vmatprep.subr.bf16.mxu0 0
    %1182 = vmatpush1.bf16.msra.mxu0 0
    %1183 = vmatprep.subr.bf16.mxu0 0
    %1184 = vmatpush1.bf16.msra.mxu0 0
    %1185 = vmatprep.subr.bf16.mxu0 0
    %1186 = vmatpush1.bf16.msra.mxu0 0
    %1187 = vmatprep.subr.bf16.mxu0 0
    %1188 = vmatpush1.bf16.msra.mxu0 0
    %1189 = vmatprep.subr.bf16.mxu0 0
    %1190 = vmatpush1.bf16.msra.mxu0 0
    %1191 = vmatprep.subr.bf16.mxu0 0
    %1192 = vmatpush1.bf16.msra.mxu0 0
    %1193 = vmatprep.subr.bf16.mxu0 0
    %1194 = vmatpush1.bf16.msra.mxu0 0
    %1195 = vmatprep.subr.bf16.mxu0 0
    %1196 = vmatpush1.bf16.msra.mxu0 0
    %1197 = vmatprep.subr.bf16.mxu0 0
    %1198 = vmatpush1.bf16.msra.mxu0 0
    %1199 = vmatprep.subr.bf16.mxu0 0
    %1200 = vmatpush1.bf16.msra.mxu0 0
    %1201 = vmatprep.subr.bf16.mxu0 0
    %1202 = vmatpush1.bf16.msra.mxu0 0
    %1203 = vmatprep.subr.bf16.mxu0 0
    %1204 = vmatpush1.bf16.msra.mxu0 0
    %1205 = vmatprep.subr.bf16.mxu0 0
    %1206 = vmatpush1.bf16.msra.mxu0 0
    %1207 = vmatprep.mubr.bf16.mxu0 0
    %1208 = vmatmul.mubr.bf16.gmra.mrb[0].mxu0 %v1173
    %v1209 = vpop.f32.mrb[0].mxu0
    %v1210 = vadd.f32 %v1163, %v1209
    %v1211 = vpop.f32.mrb[0].mxu0
    %v1212 = vpop.f32.mrb[0].mxu0
    %v1213 = vadd.f32 %v1163, %v1212
    %v1214 = vpop.f32.mrb[0].mxu0
    %1215 = vdwg.mxu0
    %v1216 = vadd.f32 %v117, %v1210
    %v1217 = vadd.f32 %v122, %v1213
    %v1218 = vsel %vm134, %v1216, 0.0
    %1219 = vadd.xlane.f32.xlu0 %v1218
    %v1220 = vpop.xlane.xlu0 %1219
    %v1221 = vsel %vm134, %v1217, 0.0
    %1222 = vadd.xlane.f32.xlu0 %v1221
    %v1223 = vpop.xlane.xlu0 %1222
    %v1224 = vmul.f32 %v1220, %v141
    %v1225 = vmul.f32 %v1223, %v141
    %v1226 = vsub.f32 %v1216, %v1224
    %v1227 = vsub.f32 %v1217, %v1225
    %v1228 = vmul.f32 %v1226, %v1226
    %v1229 = vmul.f32 %v1227, %v1227
    %v1230 = vsel %vm134, %v1228, 0.0
    %1231 = vadd.xlane.f32.xlu0 %v1230
    %v1232 = vpop.xlane.xlu0 %1231
    %v1233 = vsel %vm134, %v1229, 0.0
    %1234 = vadd.xlane.f32.xlu0 %v1233
    %v1235 = vpop.xlane.xlu0 %1234
    %v1236 = vmul.f32 %v1232, %v141
    %v1237 = vmul.f32 %v1235, %v141
    %v1238 = vadd.f32 %v1236, 1e-05
    %v1239 = vadd.f32 %v1237, 1e-05
    %v1240 = vrsqrt.pop %v1238
    %v1241 = vrsqrt.pop %v1239
    %v1242 = vmul.f32 %v1226, %v1240
    %v1243 = vmul.f32 %v1227, %v1241
    %v1244 = vlaneseq
    %v1245 = vshrl.u32 %v1244, 7
    %v1246 = vsub.s32 4, %v1245
    %v1247 = vrot.slane %v133, %v1246
    %v1248 = vmul.f32 %v1242, %v1247
    %v1249 = vmul.f32 %v1243, %v1247
    %v1250 = vlaneseq
    %v1251 = vshrl.u32 %v1250, 7
    %v1252 = vsub.s32 5, %v1251
    %v1253 = vrot.slane %v133, %v1252
    %v1254 = vadd.f32 %v1248, %v1253
    %v1255 = vadd.f32 %v1249, %v1253
    %v1256 = vpack.c.bf16 %v1255, %v1254
    %v1257 = vlaneseq
    %v1258 = vshrl.u32 %v1257, 7
    %v1259 = vsub.s32 6, %v1258
    %v1260 = vrot.slane %v133, %v1259
    %v1265 = vunpack.c.l.b16 %v126
    %v1266 = vunpack.c.l.b16 %v128
    %v1267 = vunpack.c.l.b16 %v130
    %v1268 = vunpack.c.l.b16 %v132
    %v1269 = vpack.c.b16 %v1266, %v1265
    %v1270 = vpack.c.b16 %v1268, %v1267
    %v1274 = vsel %vm134, %v1256, 0
    %1276 = vmatprep.subr.bf16.mxu0 0
    %1277 = vmatpush1.bf16.msra.mxu0 %v1269
    %1278 = vmatprep.subr.bf16.mxu0 0
    %1279 = vmatpush1.bf16.msra.mxu0 %v1270
    %1280 = vmatprep.subr.bf16.mxu0 0
    %1281 = vmatpush1.bf16.msra.mxu0 0
    %1282 = vmatprep.subr.bf16.mxu0 0
    %1283 = vmatpush1.bf16.msra.mxu0 0
    %1284 = vmatprep.subr.bf16.mxu0 0
    %1285 = vmatpush1.bf16.msra.mxu0 0
    %1286 = vmatprep.subr.bf16.mxu0 0
    %1287 = vmatpush1.bf16.msra.mxu0 0
    %1288 = vmatprep.subr.bf16.mxu0 0
    %1289 = vmatpush1.bf16.msra.mxu0 0
    %1290 = vmatprep.subr.bf16.mxu0 0
    %1291 = vmatpush1.bf16.msra.mxu0 0
    %1292 = vmatprep.subr.bf16.mxu0 0
    %1293 = vmatpush1.bf16.msra.mxu0 0
    %1294 = vmatprep.subr.bf16.mxu0 0
    %1295 = vmatpush1.bf16.msra.mxu0 0
    %1296 = vmatprep.subr.bf16.mxu0 0
    %1297 = vmatpush1.bf16.msra.mxu0 0
    %1298 = vmatprep.subr.bf16.mxu0 0
    %1299 = vmatpush1.bf16.msra.mxu0 0
    %1300 = vmatprep.subr.bf16.mxu0 0
    %1301 = vmatpush1.bf16.msra.mxu0 0
    %1302 = vmatprep.subr.bf16.mxu0 0
    %1303 = vmatpush1.bf16.msra.mxu0 0
    %1304 = vmatprep.subr.bf16.mxu0 0
    %1305 = vmatpush1.bf16.msra.mxu0 0
    %1306 = vmatprep.subr.bf16.mxu0 0
    %1307 = vmatpush1.bf16.msra.mxu0 0
    %1308 = vmatprep.mubr.bf16.mxu0 0
    %1309 = vmatmul.mubr.bf16.gmra.mrb[0].mxu0 %v1274
    %v1310 = vpop.f32.mrb[0].mxu0
    %v1311 = vadd.f32 %v1260, %v1310
    %v1312 = vpop.f32.mrb[0].mxu0
    %v1313 = vpop.f32.mrb[0].mxu0
    %v1314 = vadd.f32 %v1260, %v1313
    %v1315 = vpop.f32.mrb[0].mxu0
    %1316 = vdwg.mxu0
    %v1317 = vmul.f32 %v1311, %v1311
    %v1318 = vmul.f32 %v1314, %v1314
    %v1319 = vmul.f32 %v1311, %v1317
    %v1320 = vmul.f32 %v1314, %v1318
    %v1321 = vmul.f32 %v1319, 0.044715
    %v1322 = vmul.f32 %v1320, 0.044715
    %v1323 = vadd.f32 %v1311, %v1321
    %v1324 = vadd.f32 %v1314, %v1322
    %v1325 = vmul.f32 %v1323, 0.7978846
    %v1326 = vmul.f32 %v1324, 0.7978846
    %v1327 = vtanh.pop %v1325
    %v1328 = vtanh.pop %v1326
    %v1329 = vadd.f32 %v1327, 1.0
    %v1330 = vadd.f32 %v1328, 1.0
    %v1331 = vmul.f32 %v1329, 0.5
    %v1332 = vmul.f32 %v1330, 0.5
    %v1333 = vmul.f32 %v1311, %v1331
    %v1334 = vmul.f32 %v1314, %v1332
    %v1335 = vpack.c.bf16 %v1334, %v1333
    %v1336 = vlaneseq
    %v1337 = vshrl.u32 %v1336, 7
    %v1338 = vsub.s32 7, %v1337
    %v1339 = vrot.slane %v133, %v1338
    %v1340 = vunpack.c.h.b16 %v126
    %v1341 = vunpack.c.h.b16 %v128
    %v1342 = vunpack.c.h.b16 %v130
    %v1343 = vunpack.c.h.b16 %v132
    %v1344 = vpack.c.b16 %v1341, %v1340
    %v1345 = vpack.c.b16 %v1343, %v1342
    %v1347 = vsel %vm43, %v1335, 0
    %v1350 = vsel %vm43, %v1344, 0
    %v1353 = vsel %vm43, %v1345, 0
    %1355 = vmatprep.subr.bf16.mxu0 0
    %1356 = vmatpush1.bf16.xpose.msra.mxu0 %v1350
    %1357 = vmatprep.subr.bf16.mxu0 0
    %1358 = vmatpush1.bf16.xpose.msra.mxu0 %v1353
    %1359 = vmatprep.subr.bf16.mxu0 0
    %1360 = vmatpush1.bf16.xpose.msra.mxu0 0
    %1361 = vmatprep.subr.bf16.mxu0 0
    %1362 = vmatpush1.bf16.xpose.msra.mxu0 0
    %1363 = vmatprep.subr.bf16.mxu0 0
    %1364 = vmatpush1.bf16.xpose.msra.mxu0 0
    %1365 = vmatprep.subr.bf16.mxu0 0
    %1366 = vmatpush1.bf16.xpose.msra.mxu0 0
    %1367 = vmatprep.subr.bf16.mxu0 0
    %1368 = vmatpush1.bf16.xpose.msra.mxu0 0
    %1369 = vmatprep.subr.bf16.mxu0 0
    %1370 = vmatpush1.bf16.xpose.msra.mxu0 0
    %1371 = vmatprep.subr.bf16.mxu0 0
    %1372 = vmatpush1.bf16.xpose.msra.mxu0 0
    %1373 = vmatprep.subr.bf16.mxu0 0
    %1374 = vmatpush1.bf16.xpose.msra.mxu0 0
    %1375 = vmatprep.subr.bf16.mxu0 0
    %1376 = vmatpush1.bf16.xpose.msra.mxu0 0
    %1377 = vmatprep.subr.bf16.mxu0 0
    %1378 = vmatpush1.bf16.xpose.msra.mxu0 0
    %1379 = vmatprep.subr.bf16.mxu0 0
    %1380 = vmatpush1.bf16.xpose.msra.mxu0 0
    %1381 = vmatprep.subr.bf16.mxu0 0
    %1382 = vmatpush1.bf16.xpose.msra.mxu0 0
    %1383 = vmatprep.subr.bf16.mxu0 0
    %1384 = vmatpush1.bf16.xpose.msra.mxu0 0
    %1385 = vmatprep.subr.bf16.mxu0 0
    %1386 = vmatpush1.bf16.xpose.msra.mxu0 0
    %1387 = vmatprep.mubr.bf16.mxu0 0
    %1388 = vmatmul.mubr.bf16.gmra.mrb[0].mxu0 %v1347
    %v1389 = vpop.f32.mrb[0].mxu0
    %v1390 = vadd.f32 %v1339, %v1389
    %v1391 = vpop.f32.mrb[0].mxu0
    %v1392 = vpop.f32.mrb[0].mxu0
    %v1393 = vadd.f32 %v1339, %v1392
    %v1394 = vpop.f32.mrb[0].mxu0
    %1395 = vdwg.mxu0
    %v1396 = vadd.f32 %v1216, %v1390
    %v1397 = vadd.f32 %v1217, %v1393
    %1398 = vst.msk [vmem:[#allocation2] sm:$0xff] %vm134, %v1396
    %1399 = vst.msk [vmem:[#allocation2 + $0x8] sm:$0xff] %vm134, %v1397
    // Predicated region
    $region18: #{transformer_forward.1} parent=1 // pred_check
      _
    $region19: #{transformer_forward.1} parent=1 // pred_check_branch
      %1401 = sbr.rel (0) target = $region21
    $region20: #{transformer_forward.1} parent=1 // pred_region
      %s1403 = ssub.s32 256, 256
      %1404 = vsyncadd [#allocation3], %s1403
      %s1405 = sshll.u32 [#allocation2], 4
      %s1406 = int_to_ptr.vmem [resolvable:$true] %s1405
      %1411 = dma.vmem_to_hbm [thread:$0]  %s1406, 256, %s4, [#allocation3], 128, 128, 8
    $region21: #{transformer_forward.1} parent=1 // pred_fallthru
      _
    // Predicated region
    $region22: #{transformer_forward.1} parent=1 // pred_check
      _
    $region23: #{transformer_forward.1} parent=1 // pred_check_branch
      %1413 = sbr.rel (0) target = $region25
    $region24: #{transformer_forward.1} parent=1 // pred_region
      %1414 = dma.done [#allocation3], 256
    $region25: #{transformer_forward.1} parent=1 // pred_fallthru
      _
    %1415 = vsyncpa [#allocation3], 1

</llo_original>
